<compile_context>
chip_gen: v6e
topology: v6e:2x2x1
jax: 0.10.0
libtpu: 0.0.40
codegen_flags: <defaults>
</compile_context>

<pallas_src>
import functools
import math

import jax
import jax.numpy as jnp
from jax import lax
from jax.experimental import pallas as pl
from jax.experimental.pallas import tpu as pltpu

N_EMBD = 32                 # n_embd
N_HEAD = 4                  # n_head
HEAD_SIZE = N_EMBD // N_HEAD
FF_DIM = 4 * N_EMBD         # 128
BLOCK_SIZE = 32             # causal-mask capacity (T <= BLOCK_SIZE)
LN_EPS = 1e-5               # nn.LayerNorm default


def _layernorm(h, g, b):
    mu = jnp.mean(h, axis=-1, keepdims=True)
    var = jnp.mean((h - mu) ** 2, axis=-1, keepdims=True)   # biased, like torch
    return (h - mu) * lax.rsqrt(var + LN_EPS) * g + b


def block_kernel(x_ref, w_qkvp_ref, w_fc1_ref, w_fc2_ref, vec_ref, o_ref,
                 *, bt, t, compute_dtype):
    """One grid step = `bt` sequences of length `t`, laid out as (bt*t, C) rows."""
    C = N_EMBD
    HS = HEAD_SIZE
    M = N_HEAD * t            # expanded (head, key-position) axis
    R = bt * t
    f32 = jnp.float32

    x = x_ref[...].astype(f32)                               # (R, C)

    # Coalesced small params: rows of one (8, 128) slab.
    ln1_g = vec_ref[0:1, :C]
    ln1_b = vec_ref[1:2, :C]
    ln2_g = vec_ref[2:3, :C]
    ln2_b = vec_ref[3:4, :C]
    b_proj = vec_ref[4:5, :C]
    b_fc2 = vec_ref[5:6, :C]
    b_fc1 = vec_ref[6:7, :FF_DIM]

    # Packed attention weights: columns [wq | wk | wv | wproj], (C, 4C) = (32, 128).
    # Slicing this tiny lane-dense constant is negligible (vs. slicing activations).
    w_qkvp = w_qkvp_ref[...].astype(compute_dtype)
    w_q = w_qkvp[:, 0 * C:1 * C]
    w_k = w_qkvp[:, 1 * C:2 * C]
    w_v = w_qkvp[:, 2 * C:3 * C]
    w_p = w_qkvp[:, 3 * C:4 * C]

    # ---- constant masks, built once per step from iota + compares (no int div) ----
    mm = lax.broadcasted_iota(jnp.int32, (M, C), 0)
    cc = lax.broadcasted_iota(jnp.int32, (M, C), 1)
    r1 = lax.broadcasted_iota(jnp.int32, (M, M), 0)
    r2 = lax.broadcasted_iota(jnp.int32, (M, M), 1)
    qi = lax.broadcasted_iota(jnp.int32, (t, M), 0)
    km = lax.broadcasted_iota(jnp.int32, (t, M), 1)
    head_mask = None   # (M, C): expanded row m belongs to head h == channel's head
    seg_sum = None     # (M, M): 1 inside each head's t x t diagonal block
    causal = None      # (t, M): query i attends key j (= m - h*t) iff i >= j
    for h in range(N_HEAD):
        hm = (mm >= h * t) & (mm < (h + 1) * t) & (cc >= h * HS) & (cc < (h + 1) * HS)
        ss = (r1 >= h * t) & (r1 < (h + 1) * t) & (r2 >= h * t) & (r2 < (h + 1) * t)
        cm = (km >= h * t) & (km < (h + 1) * t) & (qi >= km - h * t)
        head_mask = hm if head_mask is None else (head_mask | hm)
        seg_sum = ss if seg_sum is None else (seg_sum | ss)
        causal = cm if causal is None else (causal | cm)
    head_mask = head_mask.astype(f32)[None]                  # (1, M, C)
    seg_sum = seg_sum.astype(f32)                            # (M, M)
    causal = causal.astype(f32)[None]                        # (1, t, M)

    # ---------------- self-attention branch: x + proj(heads(ln1(x))) ----------------
    h1 = _layernorm(x, ln1_g, ln1_b)                         # (R, C), f32
    hc = h1.astype(compute_dtype)
    q = jnp.dot(hc, w_q, preferred_element_type=f32)         # (R, C)
    k = jnp.dot(hc, w_k, preferred_element_type=f32)
    v = jnp.dot(hc, w_v, preferred_element_type=f32)

    q3 = q.reshape(bt, t, C)                                 # leading-dim split only
    # Head-expanded keys / values: row m = h*t + j carries only head h's channels.
    k_exp = jnp.concatenate([k.reshape(bt, t, C)] * N_HEAD, axis=1) * head_mask
    v_exp = jnp.concatenate([v.reshape(bt, t, C)] * N_HEAD, axis=1) * head_mask

    # All-head scores in one batched einsum (K = C = 32 contraction).
    # NOTE: reference scales by n_embd**-0.5 (NOT head_size**-0.5) — reproduced.
    s = jnp.einsum('bqc,bmc->bqm',
                   q3.astype(compute_dtype), k_exp.astype(compute_dtype),
                   preferred_element_type=f32) * (C ** -0.5)  # (bt, t, M)

    # Softmax per (query, head): mask multiplied after exp; the row-max over all
    # heads is still a per-(b, q) constant, so the math is exact.
    p = jnp.exp(s - jnp.max(s, axis=-1, keepdims=True)) * causal
    p2 = p.reshape(R, M)
    # Per-head denominators, already broadcast, via one constant matmul (MXU slot).
    denom = jnp.dot(p2, seg_sum, preferred_element_type=f32)  # (R, M)
    p2 = p2 * pl.reciprocal(denom, approx=True)                # EUP slot
    pn = p2.reshape(bt, t, M).astype(compute_dtype)

    # Weighted values: heads land directly in torch.cat column order, no concat.
    sa = jnp.einsum('bqm,bmc->bqc', pn, v_exp.astype(compute_dtype),
                    preferred_element_type=f32).reshape(R, C)
    sa = jnp.dot(sa.astype(compute_dtype), w_p, preferred_element_type=f32) + b_proj
    # dropout p = 0.0 -> identity
    x = x + sa

    # ---------------- feed-forward branch: x + W2(relu(W1(ln2(x)))) ------------------
    h2 = _layernorm(x, ln2_g, ln2_b)
    f = jnp.dot(h2.astype(compute_dtype), w_fc1_ref[...].astype(compute_dtype),
                preferred_element_type=f32) + b_fc1
    f = jnp.maximum(f, 0.0)
    f = jnp.dot(f.astype(compute_dtype), w_fc2_ref[...].astype(compute_dtype),
                preferred_element_type=f32) + b_fc2
    x = x + f

    o_ref[...] = x.astype(o_ref.dtype)


def _pick_batch_tile(B, T, batch_tile):
    """Sequences per grid step.  Prefer a divisor of B -> no jnp.pad pass."""
    step = 8 // math.gcd(T, 8)          # (bt*T) % 8 == 0  iff  bt % step == 0
    cap = max(1, min(batch_tile, B))
    for bt in range(cap, 0, -1):
        if B % bt == 0 and (bt == B or bt % step == 0):
            return bt, B
    # Rare fallback (tiny odd B/T combos): pad B up to an aligned multiple.
    bt = ((cap + step - 1) // step) * step
    n_blocks = -(-B // bt)
    return bt, n_blocks * bt


def transformer_block(x, packed_params, *, batch_tile=512,
                      compute_dtype=jnp.float32,
                      vmem_limit_bytes=32 * 1024 * 1024):
    """x: (B, T, C).  packed_params: (w_qkvp, w_fc1, w_fc2, vecs).

    batch_tile: sequences per grid step.  Default 512 (~8-10 MiB of live f32
    intermediates at T=8) fits every generation's default scoped-VMEM budget.
    v5e/v6e (128 MiB physical): raise to 1024-2048 with vmem_limit_bytes at
    64-100 MiB.  v7x (64 MiB physical, 2 TCs): keep <= 1024 and the limit
    <= ~48 MiB; the "parallel" batch axis shards grid steps across both TCs.
    compute_dtype: jnp.bfloat16 halves MXU pushes / vreg traffic on all
    generations (accumulation stays f32); default f32 for tight tolerance.
    """
    B, T, C = x.shape
    assert C == N_EMBD and T <= BLOCK_SIZE
    w_qkvp, w_fc1, w_fc2, vecs = packed_params

    bt, b_pad = _pick_batch_tile(B, T, batch_tile)
    n_blocks = b_pad // bt
    if b_pad != B:
        # TODO(synk): replace this rare fallback with a pl.when-guarded partial
        # last tile (row count via scalar prefetch) to avoid the extra HBM pass.
        x = jnp.pad(x, ((0, b_pad - B), (0, 0), (0, 0)))
    x_rows = x.reshape(b_pad * T, C)      # row-major fold outside the kernel (free)
    rows_blk = bt * T

    kernel = functools.partial(block_kernel, bt=bt, t=T, compute_dtype=compute_dtype)
    out = pl.pallas_call(
        kernel,
        out_shape=jax.ShapeDtypeStruct((b_pad * T, C), x.dtype),
        grid=(n_blocks,),
        in_specs=[
            pl.BlockSpec((rows_blk, C), lambda i: (i, 0)),
            # Weights / packed vectors: full blocks, constant index_map ->
            # VMEM-resident across every grid step.
            pl.BlockSpec(w_qkvp.shape, lambda i: (0, 0)),
            pl.BlockSpec(w_fc1.shape, lambda i: (0, 0)),
            pl.BlockSpec(w_fc2.shape, lambda i: (0, 0)),
            pl.BlockSpec(vecs.shape, lambda i: (0, 0)),
        ],
        out_specs=pl.BlockSpec((rows_blk, C), lambda i: (i, 0)),
        compiler_params=pltpu.CompilerParams(
            dimension_semantics=("parallel",),     # shards batch tiles across TCs
            vmem_limit_bytes=vmem_limit_bytes),
    )(x_rows, w_qkvp, w_fc1, w_fc2, vecs)

    return out.reshape(b_pad, T, C)[:B]


# -------------------------- parameters & pure-JAX reference --------------------------

def make_raw_params(key):
    C, H = N_EMBD, FF_DIM
    ks = jax.random.split(key, 8)
    s = 0.02
    return dict(
        ln1_g=jnp.ones((C,), jnp.float32),
        ln1_b=jnp.zeros((C,), jnp.float32),
        wq=s * jax.random.normal(ks[0], (C, C), jnp.float32),
        wk=s * jax.random.normal(ks[1], (C, C), jnp.float32),
        wv=s * jax.random.normal(ks[2], (C, C), jnp.float32),
        wproj=s * jax.random.normal(ks[3], (C, C), jnp.float32),
        bproj=s * jax.random.normal(ks[4], (C,), jnp.float32),
        ln2_g=jnp.ones((C,), jnp.float32),
        ln2_b=jnp.zeros((C,), jnp.float32),
        w1=s * jax.random.normal(ks[5], (C, H), jnp.float32),
        b1=s * jax.random.normal(ks[6], (H,), jnp.float32),
        w2=s * jax.random.normal(ks[7], (H, C), jnp.float32),
        b2=jnp.zeros((C,), jnp.float32),
    )


def pack_params(p):
    """Coalesce 13 raw tensors into 4 kernel arrays."""
    C = N_EMBD
    w_qkvp = jnp.concatenate([p['wq'], p['wk'], p['wv'], p['wproj']], axis=1)  # (C, 4C)
    vecs = jnp.zeros((8, FF_DIM), jnp.float32)
    vecs = vecs.at[0, :C].set(p['ln1_g'])
    vecs = vecs.at[1, :C].set(p['ln1_b'])
    vecs = vecs.at[2, :C].set(p['ln2_g'])
    vecs = vecs.at[3, :C].set(p['ln2_b'])
    vecs = vecs.at[4, :C].set(p['bproj'])
    vecs = vecs.at[5, :C].set(p['b2'])
    vecs = vecs.at[6, :].set(p['b1'])
    return (w_qkvp, p['w1'], p['w2'], vecs)


def reference_block(x, p):
    B, T, C = x.shape

    def ln(h, g, b):
        mu = h.mean(-1, keepdims=True)
        var = ((h - mu) ** 2).mean(-1, keepdims=True)
        return (h - mu) / jnp.sqrt(var + LN_EPS) * g + b

    h = ln(x, p['ln1_g'], p['ln1_b'])
    q = (h @ p['wq']).reshape(B, T, N_HEAD, HEAD_SIZE).transpose(0, 2, 1, 3)
    k = (h @ p['wk']).reshape(B, T, N_HEAD, HEAD_SIZE).transpose(0, 2, 1, 3)
    v = (h @ p['wv']).reshape(B, T, N_HEAD, HEAD_SIZE).transpose(0, 2, 1, 3)
    wei = (q @ k.transpose(0, 1, 3, 2)) * C ** (-0.5)
    mask = jnp.tril(jnp.ones((T, T), bool))
    wei = jnp.where(mask, wei, -jnp.inf)
    wei = jax.nn.softmax(wei, axis=-1)
    sa = (wei @ v).transpose(0, 2, 1, 3).reshape(B, T, C)
    x = x + (sa @ p['wproj'] + p['bproj'])
    h2 = ln(x, p['ln2_g'], p['ln2_b'])
    f = jnp.maximum(h2 @ p['w1'] + p['b1'], 0.0) @ p['w2'] + p['b2']
    return x + f


if __name__ == "__main__":
    key = jax.random.PRNGKey(0)
    kx, kp = jax.random.split(key)
    raw = make_raw_params(kp)
    packed = pack_params(raw)

    # Small shapes consistent with the module (T <= block_size = 32).
    B, T = 2, 8
    x = jax.random.normal(kx, (B, T, N_EMBD), jnp.float32)

    out = jax.block_until_ready(transformer_block(x, packed))
    ref = reference_block(x, raw)
    assert out.shape == (B, T, N_EMBD)
    err = float(jnp.max(jnp.abs(out - ref)))
    assert jnp.allclose(out, ref, atol=2e-4, rtol=2e-4), f"max err {err}"

    # Multi-step grid: bt=5 divides B2=20 -> no padding pass, 4 grid steps.
    B2 = 20
    x2 = jax.random.normal(jax.random.PRNGKey(1), (B2, T, N_EMBD), jnp.float32)
    out2 = jax.block_until_ready(transformer_block(x2, packed, batch_tile=8))
    ref2 = reference_block(x2, raw)
    err2 = float(jnp.max(jnp.abs(out2 - ref2)))
    assert jnp.allclose(out2, ref2, atol=2e-4, rtol=2e-4), f"max err {err2}"

    # bf16-operand path (f32 accumulation), validated at a looser tolerance.
    out3 = jax.block_until_ready(
        transformer_block(x2, packed, batch_tile=8, compute_dtype=jnp.bfloat16))
    err3 = float(jnp.max(jnp.abs(out3 - ref2)))
    assert jnp.allclose(out3, ref2, atol=2e-2, rtol=2e-2), f"bf16 max err {err3}"

    print("KERNEL_OK")
</pallas_src>

<mosaic_0001>
module attributes {stable_mosaic.version = 11 : i64} {
  func.func @block_kernel(%arg0: i32, %arg1: memref<16x32xf32, #tpu.memory_space<vmem>>, %arg2: memref<32x128xf32, #tpu.memory_space<vmem>>, %arg3: memref<32x128xf32, #tpu.memory_space<vmem>>, %arg4: memref<128x32xf32, #tpu.memory_space<vmem>>, %arg5: memref<8x128xf32, #tpu.memory_space<vmem>>, %arg6: memref<16x32xf32, #tpu.memory_space<vmem>>) attributes {dimension_semantics = [#tpu.dimension_semantics<parallel>], iteration_bounds = array<i64: 1>, scalar_prefetch = 0 : i64, scratch_operands = 0 : i64, tpu.core_type = #tpu.core_type<tc>, window_params = [{transform_indices = @transform_0, window_bounds = array<i64: 16, 32>}, {pipeline_mode = #tpu.pipeline_mode<synchronous>, transform_indices = @transform_1, window_bounds = array<i64: 32, 128>}, {pipeline_mode = #tpu.pipeline_mode<synchronous>, transform_indices = @transform_2, window_bounds = array<i64: 32, 128>}, {pipeline_mode = #tpu.pipeline_mode<synchronous>, transform_indices = @transform_3, window_bounds = array<i64: 128, 32>}, {pipeline_mode = #tpu.pipeline_mode<synchronous>, transform_indices = @transform_4, window_bounds = array<i64: 8, 128>}, {transform_indices = @transform_5, window_bounds = array<i64: 16, 32>}]} {
    %c0 = arith.constant 0 : index
    %c0_0 = arith.constant 0 : index
    %0 = vector.load %arg1[%c0, %c0_0] : memref<16x32xf32, #tpu.memory_space<vmem>>, vector<16x32xf32>
    %c0_1 = arith.constant 0 : index
    %c0_2 = arith.constant 0 : index
    %1 = vector.load %arg5[%c0_1, %c0_2] : memref<8x128xf32, #tpu.memory_space<vmem>>, vector<1x32xf32>
    %c1 = arith.constant 1 : index
    %c0_3 = arith.constant 0 : index
    %2 = vector.load %arg5[%c1, %c0_3] : memref<8x128xf32, #tpu.memory_space<vmem>>, vector<1x32xf32>
    %c2 = arith.constant 2 : index
    %c0_4 = arith.constant 0 : index
    %3 = vector.load %arg5[%c2, %c0_4] : memref<8x128xf32, #tpu.memory_space<vmem>>, vector<1x32xf32>
    %c3 = arith.constant 3 : index
    %c0_5 = arith.constant 0 : index
    %4 = vector.load %arg5[%c3, %c0_5] : memref<8x128xf32, #tpu.memory_space<vmem>>, vector<1x32xf32>
    %c4 = arith.constant 4 : index
    %c0_6 = arith.constant 0 : index
    %5 = vector.load %arg5[%c4, %c0_6] : memref<8x128xf32, #tpu.memory_space<vmem>>, vector<1x32xf32>
    %c5 = arith.constant 5 : index
    %c0_7 = arith.constant 0 : index
    %6 = vector.load %arg5[%c5, %c0_7] : memref<8x128xf32, #tpu.memory_space<vmem>>, vector<1x32xf32>
    %c6 = arith.constant 6 : index
    %c0_8 = arith.constant 0 : index
    %7 = vector.load %arg5[%c6, %c0_8] : memref<8x128xf32, #tpu.memory_space<vmem>>, vector<1x128xf32>
    %c0_9 = arith.constant 0 : index
    %c0_10 = arith.constant 0 : index
    %8 = vector.load %arg2[%c0_9, %c0_10] : memref<32x128xf32, #tpu.memory_space<vmem>>, vector<32x128xf32>
    %9 = vector.extract_strided_slice %8 {offsets = [0, 0], sizes = [32, 32], strides = [1, 1]} : vector<32x128xf32> to vector<32x32xf32>
    %10 = vector.extract_strided_slice %8 {offsets = [0, 32], sizes = [32, 32], strides = [1, 1]} : vector<32x128xf32> to vector<32x32xf32>
    %11 = vector.extract_strided_slice %8 {offsets = [0, 64], sizes = [32, 32], strides = [1, 1]} : vector<32x128xf32> to vector<32x32xf32>
    %12 = vector.extract_strided_slice %8 {offsets = [0, 96], sizes = [32, 32], strides = [1, 1]} : vector<32x128xf32> to vector<32x32xf32>
    %13 = tpu.iota {dimensions = array<i32: 0>} : vector<32x32xi32>
    %14 = tpu.iota {dimensions = array<i32: 1>} : vector<32x32xi32>
    %15 = tpu.iota {dimensions = array<i32: 0>} : vector<32x32xi32>
    %16 = tpu.iota {dimensions = array<i32: 1>} : vector<32x32xi32>
    %17 = tpu.iota {dimensions = array<i32: 0>} : vector<8x32xi32>
    %18 = tpu.iota {dimensions = array<i32: 1>} : vector<8x32xi32>
    %c0_i32 = arith.constant 0 : i32
    %19 = vector.broadcast %c0_i32 : i32 to vector<32x32xi32>
    %20 = arith.cmpi sge, %13, %19 : vector<32x32xi32>
    %c8_i32 = arith.constant 8 : i32
    %21 = vector.broadcast %c8_i32 : i32 to vector<32x32xi32>
    %22 = arith.cmpi slt, %13, %21 : vector<32x32xi32>
    %23 = arith.andi %20, %22 : vector<32x32xi1>
    %c0_i32_11 = arith.constant 0 : i32
    %24 = vector.broadcast %c0_i32_11 : i32 to vector<32x32xi32>
    %25 = arith.cmpi sge, %14, %24 : vector<32x32xi32>
    %26 = arith.andi %23, %25 : vector<32x32xi1>
    %c8_i32_12 = arith.constant 8 : i32
    %27 = vector.broadcast %c8_i32_12 : i32 to vector<32x32xi32>
    %28 = arith.cmpi slt, %14, %27 : vector<32x32xi32>
    %29 = arith.andi %26, %28 : vector<32x32xi1>
    %c0_i32_13 = arith.constant 0 : i32
    %30 = vector.broadcast %c0_i32_13 : i32 to vector<32x32xi32>
    %31 = arith.cmpi sge, %15, %30 : vector<32x32xi32>
    %c8_i32_14 = arith.constant 8 : i32
    %32 = vector.broadcast %c8_i32_14 : i32 to vector<32x32xi32>
    %33 = arith.cmpi slt, %15, %32 : vector<32x32xi32>
    %34 = arith.andi %31, %33 : vector<32x32xi1>
    %c0_i32_15 = arith.constant 0 : i32
    %35 = vector.broadcast %c0_i32_15 : i32 to vector<32x32xi32>
    %36 = arith.cmpi sge, %16, %35 : vector<32x32xi32>
    %37 = arith.andi %34, %36 : vector<32x32xi1>
    %c8_i32_16 = arith.constant 8 : i32
    %38 = vector.broadcast %c8_i32_16 : i32 to vector<32x32xi32>
    %39 = arith.cmpi slt, %16, %38 : vector<32x32xi32>
    %40 = arith.andi %37, %39 : vector<32x32xi1>
    %c0_i32_17 = arith.constant 0 : i32
    %41 = vector.broadcast %c0_i32_17 : i32 to vector<8x32xi32>
    %42 = arith.cmpi sge, %18, %41 : vector<8x32xi32>
    %c8_i32_18 = arith.constant 8 : i32
    %43 = vector.broadcast %c8_i32_18 : i32 to vector<8x32xi32>
    %44 = arith.cmpi slt, %18, %43 : vector<8x32xi32>
    %45 = arith.andi %42, %44 : vector<8x32xi1>
    %c0_i32_19 = arith.constant 0 : i32
    %46 = vector.broadcast %c0_i32_19 : i32 to vector<8x32xi32>
    %47 = arith.subi %18, %46 : vector<8x32xi32>
    %48 = arith.cmpi sge, %17, %47 : vector<8x32xi32>
    %49 = arith.andi %45, %48 : vector<8x32xi1>
    %c8_i32_20 = arith.constant 8 : i32
    %50 = vector.broadcast %c8_i32_20 : i32 to vector<32x32xi32>
    %51 = arith.cmpi sge, %13, %50 : vector<32x32xi32>
    %c16_i32 = arith.constant 16 : i32
    %52 = vector.broadcast %c16_i32 : i32 to vector<32x32xi32>
    %53 = arith.cmpi slt, %13, %52 : vector<32x32xi32>
    %54 = arith.andi %51, %53 : vector<32x32xi1>
    %c8_i32_21 = arith.constant 8 : i32
    %55 = vector.broadcast %c8_i32_21 : i32 to vector<32x32xi32>
    %56 = arith.cmpi sge, %14, %55 : vector<32x32xi32>
    %57 = arith.andi %54, %56 : vector<32x32xi1>
    %c16_i32_22 = arith.constant 16 : i32
    %58 = vector.broadcast %c16_i32_22 : i32 to vector<32x32xi32>
    %59 = arith.cmpi slt, %14, %58 : vector<32x32xi32>
    %60 = arith.andi %57, %59 : vector<32x32xi1>
    %c8_i32_23 = arith.constant 8 : i32
    %61 = vector.broadcast %c8_i32_23 : i32 to vector<32x32xi32>
    %62 = arith.cmpi sge, %15, %61 : vector<32x32xi32>
    %c16_i32_24 = arith.constant 16 : i32
    %63 = vector.broadcast %c16_i32_24 : i32 to vector<32x32xi32>
    %64 = arith.cmpi slt, %15, %63 : vector<32x32xi32>
    %65 = arith.andi %62, %64 : vector<32x32xi1>
    %c8_i32_25 = arith.constant 8 : i32
    %66 = vector.broadcast %c8_i32_25 : i32 to vector<32x32xi32>
    %67 = arith.cmpi sge, %16, %66 : vector<32x32xi32>
    %68 = arith.andi %65, %67 : vector<32x32xi1>
    %c16_i32_26 = arith.constant 16 : i32
    %69 = vector.broadcast %c16_i32_26 : i32 to vector<32x32xi32>
    %70 = arith.cmpi slt, %16, %69 : vector<32x32xi32>
    %71 = arith.andi %68, %70 : vector<32x32xi1>
    %c8_i32_27 = arith.constant 8 : i32
    %72 = vector.broadcast %c8_i32_27 : i32 to vector<8x32xi32>
    %73 = arith.cmpi sge, %18, %72 : vector<8x32xi32>
    %c16_i32_28 = arith.constant 16 : i32
    %74 = vector.broadcast %c16_i32_28 : i32 to vector<8x32xi32>
    %75 = arith.cmpi slt, %18, %74 : vector<8x32xi32>
    %76 = arith.andi %73, %75 : vector<8x32xi1>
    %c8_i32_29 = arith.constant 8 : i32
    %77 = vector.broadcast %c8_i32_29 : i32 to vector<8x32xi32>
    %78 = arith.subi %18, %77 : vector<8x32xi32>
    %79 = arith.cmpi sge, %17, %78 : vector<8x32xi32>
    %80 = arith.andi %76, %79 : vector<8x32xi1>
    %81 = arith.ori %29, %60 : vector<32x32xi1>
    %82 = arith.ori %40, %71 : vector<32x32xi1>
    %83 = arith.ori %49, %80 : vector<8x32xi1>
    %c16_i32_30 = arith.constant 16 : i32
    %84 = vector.broadcast %c16_i32_30 : i32 to vector<32x32xi32>
    %85 = arith.cmpi sge, %13, %84 : vector<32x32xi32>
    %c24_i32 = arith.constant 24 : i32
    %86 = vector.broadcast %c24_i32 : i32 to vector<32x32xi32>
    %87 = arith.cmpi slt, %13, %86 : vector<32x32xi32>
    %88 = arith.andi %85, %87 : vector<32x32xi1>
    %c16_i32_31 = arith.constant 16 : i32
    %89 = vector.broadcast %c16_i32_31 : i32 to vector<32x32xi32>
    %90 = arith.cmpi sge, %14, %89 : vector<32x32xi32>
    %91 = arith.andi %88, %90 : vector<32x32xi1>
    %c24_i32_32 = arith.constant 24 : i32
    %92 = vector.broadcast %c24_i32_32 : i32 to vector<32x32xi32>
    %93 = arith.cmpi slt, %14, %92 : vector<32x32xi32>
    %94 = arith.andi %91, %93 : vector<32x32xi1>
    %c16_i32_33 = arith.constant 16 : i32
    %95 = vector.broadcast %c16_i32_33 : i32 to vector<32x32xi32>
    %96 = arith.cmpi sge, %15, %95 : vector<32x32xi32>
    %c24_i32_34 = arith.constant 24 : i32
    %97 = vector.broadcast %c24_i32_34 : i32 to vector<32x32xi32>
    %98 = arith.cmpi slt, %15, %97 : vector<32x32xi32>
    %99 = arith.andi %96, %98 : vector<32x32xi1>
    %c16_i32_35 = arith.constant 16 : i32
    %100 = vector.broadcast %c16_i32_35 : i32 to vector<32x32xi32>
    %101 = arith.cmpi sge, %16, %100 : vector<32x32xi32>
    %102 = arith.andi %99, %101 : vector<32x32xi1>
    %c24_i32_36 = arith.constant 24 : i32
    %103 = vector.broadcast %c24_i32_36 : i32 to vector<32x32xi32>
    %104 = arith.cmpi slt, %16, %103 : vector<32x32xi32>
    %105 = arith.andi %102, %104 : vector<32x32xi1>
    %c16_i32_37 = arith.constant 16 : i32
    %106 = vector.broadcast %c16_i32_37 : i32 to vector<8x32xi32>
    %107 = arith.cmpi sge, %18, %106 : vector<8x32xi32>
    %c24_i32_38 = arith.constant 24 : i32
    %108 = vector.broadcast %c24_i32_38 : i32 to vector<8x32xi32>
    %109 = arith.cmpi slt, %18, %108 : vector<8x32xi32>
    %110 = arith.andi %107, %109 : vector<8x32xi1>
    %c16_i32_39 = arith.constant 16 : i32
    %111 = vector.broadcast %c16_i32_39 : i32 to vector<8x32xi32>
    %112 = arith.subi %18, %111 : vector<8x32xi32>
    %113 = arith.cmpi sge, %17, %112 : vector<8x32xi32>
    %114 = arith.andi %110, %113 : vector<8x32xi1>
    %115 = arith.ori %81, %94 : vector<32x32xi1>
    %116 = arith.ori %82, %105 : vector<32x32xi1>
    %117 = arith.ori %83, %114 : vector<8x32xi1>
    %c24_i32_40 = arith.constant 24 : i32
    %118 = vector.broadcast %c24_i32_40 : i32 to vector<32x32xi32>
    %119 = arith.cmpi sge, %13, %118 : vector<32x32xi32>
    %c32_i32 = arith.constant 32 : i32
    %120 = vector.broadcast %c32_i32 : i32 to vector<32x32xi32>
    %121 = arith.cmpi slt, %13, %120 : vector<32x32xi32>
    %122 = arith.andi %119, %121 : vector<32x32xi1>
    %c24_i32_41 = arith.constant 24 : i32
    %123 = vector.broadcast %c24_i32_41 : i32 to vector<32x32xi32>
    %124 = arith.cmpi sge, %14, %123 : vector<32x32xi32>
    %125 = arith.andi %122, %124 : vector<32x32xi1>
    %c32_i32_42 = arith.constant 32 : i32
    %126 = vector.broadcast %c32_i32_42 : i32 to vector<32x32xi32>
    %127 = arith.cmpi slt, %14, %126 : vector<32x32xi32>
    %128 = arith.andi %125, %127 : vector<32x32xi1>
    %c24_i32_43 = arith.constant 24 : i32
    %129 = vector.broadcast %c24_i32_43 : i32 to vector<32x32xi32>
    %130 = arith.cmpi sge, %15, %129 : vector<32x32xi32>
    %c32_i32_44 = arith.constant 32 : i32
    %131 = vector.broadcast %c32_i32_44 : i32 to vector<32x32xi32>
    %132 = arith.cmpi slt, %15, %131 : vector<32x32xi32>
    %133 = arith.andi %130, %132 : vector<32x32xi1>
    %c24_i32_45 = arith.constant 24 : i32
    %134 = vector.broadcast %c24_i32_45 : i32 to vector<32x32xi32>
    %135 = arith.cmpi sge, %16, %134 : vector<32x32xi32>
    %136 = arith.andi %133, %135 : vector<32x32xi1>
    %c32_i32_46 = arith.constant 32 : i32
    %137 = vector.broadcast %c32_i32_46 : i32 to vector<32x32xi32>
    %138 = arith.cmpi slt, %16, %137 : vector<32x32xi32>
    %139 = arith.andi %136, %138 : vector<32x32xi1>
    %c24_i32_47 = arith.constant 24 : i32
    %140 = vector.broadcast %c24_i32_47 : i32 to vector<8x32xi32>
    %141 = arith.cmpi sge, %18, %140 : vector<8x32xi32>
    %c32_i32_48 = arith.constant 32 : i32
    %142 = vector.broadcast %c32_i32_48 : i32 to vector<8x32xi32>
    %143 = arith.cmpi slt, %18, %142 : vector<8x32xi32>
    %144 = arith.andi %141, %143 : vector<8x32xi1>
    %c24_i32_49 = arith.constant 24 : i32
    %145 = vector.broadcast %c24_i32_49 : i32 to vector<8x32xi32>
    %146 = arith.subi %18, %145 : vector<8x32xi32>
    %147 = arith.cmpi sge, %17, %146 : vector<8x32xi32>
    %148 = arith.andi %144, %147 : vector<8x32xi1>
    %149 = arith.ori %115, %128 : vector<32x32xi1>
    %150 = arith.ori %116, %139 : vector<32x32xi1>
    %151 = arith.ori %117, %148 : vector<8x32xi1>
    %152 = arith.extui %149 : vector<32x32xi1> to vector<32x32xi32>
    %153 = arith.sitofp %152 : vector<32x32xi32> to vector<32x32xf32>
    %154 = vector.shape_cast %153 : vector<32x32xf32> to vector<1x32x32xf32>
    %155 = arith.extui %150 : vector<32x32xi1> to vector<32x32xi32>
    %156 = arith.sitofp %155 : vector<32x32xi32> to vector<32x32xf32>
    %157 = arith.extui %151 : vector<8x32xi1> to vector<8x32xi32>
    %158 = arith.sitofp %157 : vector<8x32xi32> to vector<8x32xf32>
    %159 = vector.shape_cast %158 : vector<8x32xf32> to vector<1x8x32xf32>
    %cst = arith.constant dense<0.000000e+00> : vector<16xf32>
    %160 = vector.multi_reduction <add>, %0, %cst [1] : vector<16x32xf32> to vector<16xf32>
    %161 = vector.shape_cast %160 : vector<16xf32> to vector<16x1xf32>
    %cst_50 = arith.constant 3.200000e+01 : f32
    %162 = vector.broadcast %cst_50 : f32 to vector<16x1xf32>
    %163 = arith.divf %161, %162 : vector<16x1xf32>
    %164 = vector.broadcast %163 : vector<16x1xf32> to vector<16x32xf32>
    %165 = arith.subf %0, %164 : vector<16x32xf32>
    %166 = arith.mulf %165, %165 : vector<16x32xf32>
    %cst_51 = arith.constant dense<0.000000e+00> : vector<16xf32>
    %167 = vector.multi_reduction <add>, %166, %cst_51 [1] : vector<16x32xf32> to vector<16xf32>
    %168 = vector.shape_cast %167 : vector<16xf32> to vector<16x1xf32>
    %cst_52 = arith.constant 3.200000e+01 : f32
    %169 = vector.broadcast %cst_52 : f32 to vector<16x1xf32>
    %170 = arith.divf %168, %169 : vector<16x1xf32>
    %171 = vector.broadcast %163 : vector<16x1xf32> to vector<16x32xf32>
    %172 = arith.subf %0, %171 : vector<16x32xf32>
    %cst_53 = arith.constant 9.99999974E-6 : f32
    %173 = vector.broadcast %cst_53 : f32 to vector<16x1xf32>
    %174 = arith.addf %170, %173 : vector<16x1xf32>
    %175 = math.rsqrt %174 : vector<16x1xf32>
    %176 = vector.broadcast %175 : vector<16x1xf32> to vector<16x32xf32>
    %177 = arith.mulf %172, %176 : vector<16x32xf32>
    %178 = vector.broadcast %1 : vector<1x32xf32> to vector<16x32xf32>
    %179 = arith.mulf %177, %178 : vector<16x32xf32>
    %180 = vector.broadcast %2 : vector<1x32xf32> to vector<16x32xf32>
    %181 = arith.addf %179, %180 : vector<16x32xf32>
    %cst_54 = arith.constant dense<0.000000e+00> : vector<16x32xf32>
    %182 = tpu.matmul %181, %9, %cst_54 {dimension_numbers = #tpu.dot_dimension_numbers<[1], [0], [0], [1], [0, 0, 1, 1], [], []>} : vector<16x32xf32>, vector<32x32xf32>, vector<16x32xf32> -> vector<16x32xf32>
    %cst_55 = arith.constant dense<0.000000e+00> : vector<16x32xf32>
    %183 = tpu.matmul %181, %10, %cst_55 {dimension_numbers = #tpu.dot_dimension_numbers<[1], [0], [0], [1], [0, 0, 1, 1], [], []>} : vector<16x32xf32>, vector<32x32xf32>, vector<16x32xf32> -> vector<16x32xf32>
    %cst_56 = arith.constant dense<0.000000e+00> : vector<16x32xf32>
    %184 = tpu.matmul %181, %11, %cst_56 {dimension_numbers = #tpu.dot_dimension_numbers<[1], [0], [0], [1], [0, 0, 1, 1], [], []>} : vector<16x32xf32>, vector<32x32xf32>, vector<16x32xf32> -> vector<16x32xf32>
    %185 = vector.shape_cast %182 : vector<16x32xf32> to vector<2x8x32xf32>
    %186 = vector.shape_cast %183 : vector<16x32xf32> to vector<2x8x32xf32>
    %187 = tpu.concatenate %186, %186, %186, %186 in 1 : vector<2x8x32xf32>, vector<2x8x32xf32>, vector<2x8x32xf32>, vector<2x8x32xf32> -> vector<2x32x32xf32>
    %188 = vector.broadcast %154 : vector<1x32x32xf32> to vector<2x32x32xf32>
    %189 = arith.mulf %187, %188 : vector<2x32x32xf32>
    %190 = vector.shape_cast %184 : vector<16x32xf32> to vector<2x8x32xf32>
    %191 = tpu.concatenate %190, %190, %190, %190 in 1 : vector<2x8x32xf32>, vector<2x8x32xf32>, vector<2x8x32xf32>, vector<2x8x32xf32> -> vector<2x32x32xf32>
    %192 = vector.broadcast %154 : vector<1x32x32xf32> to vector<2x32x32xf32>
    %193 = arith.mulf %191, %192 : vector<2x32x32xf32>
    "tpu.trace_start"() <{level = 10 : i32, message = "bqc,bmc->bqm"}> : () -> ()
    %cst_57 = arith.constant dense<0.000000e+00> : vector<2x8x32xf32>
    %194 = tpu.matmul %185, %189, %cst_57 {dimension_numbers = #tpu.dot_dimension_numbers<[2], [2], [1], [1], [0, 0, 0, 1, 1, 1], [0], [0]>} : vector<2x8x32xf32>, vector<2x32x32xf32>, vector<2x8x32xf32> -> vector<2x8x32xf32>
    "tpu.trace_stop"() : () -> ()
    %cst_58 = arith.constant 0.176776692 : f32
    %195 = vector.broadcast %cst_58 : f32 to vector<2x8x32xf32>
    %196 = arith.mulf %194, %195 : vector<2x8x32xf32>
    %cst_59 = arith.constant dense<0xFF800000> : vector<2x8xf32>
    %197 = vector.multi_reduction <maximumf>, %196, %cst_59 [2] : vector<2x8x32xf32> to vector<2x8xf32>
    %198 = vector.shape_cast %197 : vector<2x8xf32> to vector<2x8x1xf32>
    %199 = vector.broadcast %198 : vector<2x8x1xf32> to vector<2x8x32xf32>
    %200 = arith.subf %196, %199 : vector<2x8x32xf32>
    %201 = math.exp %200 : vector<2x8x32xf32>
    %202 = vector.broadcast %159 : vector<1x8x32xf32> to vector<2x8x32xf32>
    %203 = arith.mulf %201, %202 : vector<2x8x32xf32>
    %204 = vector.shape_cast %203 : vector<2x8x32xf32> to vector<16x32xf32>
    %cst_60 = arith.constant dense<0.000000e+00> : vector<16x32xf32>
    %205 = tpu.matmul %204, %156, %cst_60 {dimension_numbers = #tpu.dot_dimension_numbers<[1], [0], [0], [1], [0, 0, 1, 1], [], []>} : vector<16x32xf32>, vector<32x32xf32>, vector<16x32xf32> -> vector<16x32xf32>
    %206 = tpu.reciprocal %205 {approx = true} : vector<16x32xf32> -> vector<16x32xf32>
    %207 = arith.mulf %204, %206 : vector<16x32xf32>
    %208 = vector.shape_cast %207 : vector<16x32xf32> to vector<2x8x32xf32>
    "tpu.trace_start"() <{level = 10 : i32, message = "bqm,bmc->bqc"}> : () -> ()
    %cst_61 = arith.constant dense<0.000000e+00> : vector<2x8x32xf32>
    %209 = tpu.matmul %208, %193, %cst_61 {dimension_numbers = #tpu.dot_dimension_numbers<[2], [1], [1], [2], [0, 0, 0, 1, 1, 2], [0], [0]>} : vector<2x8x32xf32>, vector<2x32x32xf32>, vector<2x8x32xf32> -> vector<2x8x32xf32>
    "tpu.trace_stop"() : () -> ()
    %210 = vector.shape_cast %209 : vector<2x8x32xf32> to vector<16x32xf32>
    %cst_62 = arith.constant dense<0.000000e+00> : vector<16x32xf32>
    %211 = tpu.matmul %210, %12, %cst_62 {dimension_numbers = #tpu.dot_dimension_numbers<[1], [0], [0], [1], [0, 0, 1, 1], [], []>} : vector<16x32xf32>, vector<32x32xf32>, vector<16x32xf32> -> vector<16x32xf32>
    %212 = vector.broadcast %5 : vector<1x32xf32> to vector<16x32xf32>
    %213 = arith.addf %211, %212 : vector<16x32xf32>
    %214 = arith.addf %0, %213 : vector<16x32xf32>
    %cst_63 = arith.constant dense<0.000000e+00> : vector<16xf32>
    %215 = vector.multi_reduction <add>, %214, %cst_63 [1] : vector<16x32xf32> to vector<16xf32>
    %216 = vector.shape_cast %215 : vector<16xf32> to vector<16x1xf32>
    %cst_64 = arith.constant 3.200000e+01 : f32
    %217 = vector.broadcast %cst_64 : f32 to vector<16x1xf32>
    %218 = arith.divf %216, %217 : vector<16x1xf32>
    %219 = vector.broadcast %218 : vector<16x1xf32> to vector<16x32xf32>
    %220 = arith.subf %214, %219 : vector<16x32xf32>
    %221 = arith.mulf %220, %220 : vector<16x32xf32>
    %cst_65 = arith.constant dense<0.000000e+00> : vector<16xf32>
    %222 = vector.multi_reduction <add>, %221, %cst_65 [1] : vector<16x32xf32> to vector<16xf32>
    %223 = vector.shape_cast %222 : vector<16xf32> to vector<16x1xf32>
    %cst_66 = arith.constant 3.200000e+01 : f32
    %224 = vector.broadcast %cst_66 : f32 to vector<16x1xf32>
    %225 = arith.divf %223, %224 : vector<16x1xf32>
    %226 = vector.broadcast %218 : vector<16x1xf32> to vector<16x32xf32>
    %227 = arith.subf %214, %226 : vector<16x32xf32>
    %cst_67 = arith.constant 9.99999974E-6 : f32
    %228 = vector.broadcast %cst_67 : f32 to vector<16x1xf32>
    %229 = arith.addf %225, %228 : vector<16x1xf32>
    %230 = math.rsqrt %229 : vector<16x1xf32>
    %231 = vector.broadcast %230 : vector<16x1xf32> to vector<16x32xf32>
    %232 = arith.mulf %227, %231 : vector<16x32xf32>
    %233 = vector.broadcast %3 : vector<1x32xf32> to vector<16x32xf32>
    %234 = arith.mulf %232, %233 : vector<16x32xf32>
    %235 = vector.broadcast %4 : vector<1x32xf32> to vector<16x32xf32>
    %236 = arith.addf %234, %235 : vector<16x32xf32>
    %c0_68 = arith.constant 0 : index
    %c0_69 = arith.constant 0 : index
    %237 = vector.load %arg3[%c0_68, %c0_69] : memref<32x128xf32, #tpu.memory_space<vmem>>, vector<32x128xf32>
    %cst_70 = arith.constant dense<0.000000e+00> : vector<16x128xf32>
    %238 = tpu.matmul %236, %237, %cst_70 {dimension_numbers = #tpu.dot_dimension_numbers<[1], [0], [0], [1], [0, 0, 1, 1], [], []>} : vector<16x32xf32>, vector<32x128xf32>, vector<16x128xf32> -> vector<16x128xf32>
    %239 = vector.broadcast %7 : vector<1x128xf32> to vector<16x128xf32>
    %240 = arith.addf %238, %239 : vector<16x128xf32>
    %cst_71 = arith.constant 0.000000e+00 : f32
    %241 = vector.broadcast %cst_71 : f32 to vector<16x128xf32>
    %242 = arith.maximumf %240, %241 : vector<16x128xf32>
    %c0_72 = arith.constant 0 : index
    %c0_73 = arith.constant 0 : index
    %243 = vector.load %arg4[%c0_72, %c0_73] : memref<128x32xf32, #tpu.memory_space<vmem>>, vector<128x32xf32>
    %cst_74 = arith.constant dense<0.000000e+00> : vector<16x32xf32>
    %244 = tpu.matmul %242, %243, %cst_74 {dimension_numbers = #tpu.dot_dimension_numbers<[1], [0], [0], [1], [0, 0, 1, 1], [], []>} : vector<16x128xf32>, vector<128x32xf32>, vector<16x32xf32> -> vector<16x32xf32>
    %245 = vector.broadcast %6 : vector<1x32xf32> to vector<16x32xf32>
    %246 = arith.addf %244, %245 : vector<16x32xf32>
    %247 = arith.addf %214, %246 : vector<16x32xf32>
    %c0_75 = arith.constant 0 : index
    %c0_76 = arith.constant 0 : index
    %248 = vector.load %arg6[%c0_75, %c0_76] : memref<16x32xf32, #tpu.memory_space<vmem>>, vector<16x32xf32>
    tpu.vector_store %arg6[%c0_75, %c0_76], %247 {strides = array<i32>} : memref<16x32xf32, #tpu.memory_space<vmem>>, vector<16x32xf32>,
    return
  }
  func.func @transform_0(%arg0: i32) -> (i32, i32) {
    %c0_i32 = arith.constant 0 : i32
    %c0_i32_0 = arith.constant 0 : i32
    return %arg0, %c0_i32 : i32, i32
  }
  func.func @transform_1(%arg0: i32) -> (i32, i32) {
    %c0_i32 = arith.constant 0 : i32
    %c0_i32_0 = arith.constant 0 : i32
    %c0_i32_1 = arith.constant 0 : i32
    return %c0_i32, %c0_i32_0 : i32, i32
  }
  func.func @transform_2(%arg0: i32) -> (i32, i32) {
    %c0_i32 = arith.constant 0 : i32
    %c0_i32_0 = arith.constant 0 : i32
    %c0_i32_1 = arith.constant 0 : i32
    return %c0_i32, %c0_i32_0 : i32, i32
  }
  func.func @transform_3(%arg0: i32) -> (i32, i32) {
    %c0_i32 = arith.constant 0 : i32
    %c0_i32_0 = arith.constant 0 : i32
    %c0_i32_1 = arith.constant 0 : i32
    return %c0_i32, %c0_i32_0 : i32, i32
  }
  func.func @transform_4(%arg0: i32) -> (i32, i32) {
    %c0_i32 = arith.constant 0 : i32
    %c0_i32_0 = arith.constant 0 : i32
    %c0_i32_1 = arith.constant 0 : i32
    return %c0_i32, %c0_i32_0 : i32, i32
  }
  func.func @transform_5(%arg0: i32) -> (i32, i32) {
    %c0_i32 = arith.constant 0 : i32
    %c0_i32_0 = arith.constant 0 : i32
    return %arg0, %c0_i32 : i32, i32
  }
}

</mosaic_0001>

<llo_original>
// kernel: tpu_custom_call.1
$region0: #{tpu_custom_call.1}
  #allocation0 [shape = 'u32[]', space=smem, size = 0x4, offset = 0x4, fixed_abs, tag = 'smem constant byte address 0x4 - core index']
  #allocation1 [shape = 'u32[144,128]{1,0:T(1,128)}', space=vmem, size = 0x12000, scoped, tag = 'internal scratch']
  %s0 = inlined_call_operand.vmem [shape: f32[16,32], index: 0, kind: input, shape index: {}]
  %s1 = inlined_call_operand.vmem [shape: f32[32,128], index: 1, kind: input, shape index: {}]
  %s2 = inlined_call_operand.vmem [shape: f32[32,128], index: 2, kind: input, shape index: {}]
  %s3 = inlined_call_operand.vmem [shape: f32[128,32], index: 3, kind: input, shape index: {}]
  %s4 = inlined_call_operand.vmem [shape: f32[8,128], index: 4, kind: input, shape index: {}]
  %s5 = inlined_call_operand.hbm [shape: f32[16,32], index: 5, kind: output, shape index: {}]
  %s6 = sld [smem:[#allocation0]]
  $region30: #{tpu_custom_call.1} parent=0
    _
  %s8 = ssub.s32 1, %s6
  %s9 = scalar_select 0, %s8, %s6
  $region1: #{tpu_custom_call.1} parent=0
    #allocation2 [shape = 'u8[8192]{0}', space=vmem, size = 0x2000, scoped, tag = 'output window, operand 0, single buffered']
    #allocation3 [shape = 's32[1]{0}', space=sflag, size = 0x4, scoped, tag = 'scoped memory for tpu_custom_call.1']
    %10 = vsyncpa [#allocation3], 0
    // Predicated region
    $region2: #{tpu_custom_call.1} parent=1 // pred_check
      _
    $region3: #{tpu_custom_call.1} parent=1 // pred_check_branch
      %12 = sbr.rel (0) target = $region5
    $region4: #{tpu_custom_call.1} parent=1 // pred_region
      _
    $region5: #{tpu_custom_call.1} parent=1 // pred_fallthru
      _
    // Predicated region
    $region6: #{tpu_custom_call.1} parent=1 // pred_check
      _
    $region7: #{tpu_custom_call.1} parent=1 // pred_check_branch
      %14 = sbr.rel (0) target = $region9
    $region8: #{tpu_custom_call.1} parent=1 // pred_region
      _
    $region9: #{tpu_custom_call.1} parent=1 // pred_fallthru
      _
    // Predicated region
    $region10: #{tpu_custom_call.1} parent=1 // pred_check
      _
    $region11: #{tpu_custom_call.1} parent=1 // pred_check_branch
      %16 = sbr.rel (0) target = $region13
    $region12: #{tpu_custom_call.1} parent=1 // pred_region
      _
    $region13: #{tpu_custom_call.1} parent=1 // pred_fallthru
      _
    // Predicated region
    $region14: #{tpu_custom_call.1} parent=1 // pred_check
      _
    $region15: #{tpu_custom_call.1} parent=1 // pred_check_branch
      %18 = sbr.rel (0) target = $region17
    $region16: #{tpu_custom_call.1} parent=1 // pred_region
      _
    $region17: #{tpu_custom_call.1} parent=1 // pred_fallthru
      _
    // Predicated region
    $region18: #{tpu_custom_call.1} parent=1 // pred_check
      _
    $region19: #{tpu_custom_call.1} parent=1 // pred_check_branch
      %20 = sbr.rel (0) target = $region21
    $region20: #{tpu_custom_call.1} parent=1 // pred_region
      _
    $region21: #{tpu_custom_call.1} parent=1 // pred_fallthru
      _
    %v21 = vld [vmem:[%s0] sm:$0xff]
    %v22 = vld [vmem:[%s0 + $0x8] sm:$0xff]
    %v23 = vld [vmem:[%s4] sm:$0x1]
    %v24 = vld [vmem:[%s4 + $0x1] sm:$0x1]
    %v25 = vld [vmem:[%s4 + $0x2] sm:$0x1]
    %v26 = vld [vmem:[%s4 + $0x3] sm:$0x1]
    %v27 = vld [vmem:[%s4 + $0x4] sm:$0x1]
    %v28 = vld [vmem:[%s4 + $0x5] sm:$0x1]
    %v29 = vld [vmem:[%s4 + $0x6] sm:$0x1]
    %v30 = vld [vmem:[%s1] sm:$0xff]
    %v31 = vld [vmem:[%s1 + $0x8] sm:$0xff]
    %v32 = vld [vmem:[%s1 + $0x10] sm:$0xff]
    %v33 = vld [vmem:[%s1 + $0x18] sm:$0xff]
    %v34 = vlaneseq
    %v35 = vshrl.u32 %v34, 7
    %v36 = vadd.s32 %v35, 8
    %v37 = vadd.s32 %v35, 16
    %v38 = vadd.s32 %v35, 24
    %v39 = vlaneseq
    %v40 = vand.u32 %v39, 127
    %vm41 = vcmp.ge.s32.totalorder %v35, 0
    %vm42 = vcmp.ge.s32.totalorder %v36, 0
    %vm43 = vcmp.ge.s32.totalorder %v37, 0
    %vm44 = vcmp.ge.s32.totalorder %v38, 0
    %vm45 = vcmp.lt.s32.totalorder %v35, 8
    %vm46 = vcmp.lt.s32.totalorder %v36, 8
    %vm47 = vcmp.lt.s32.totalorder %v37, 8
    %vm48 = vcmp.lt.s32.totalorder %v38, 8
    %vm49 = vmand %vm41, %vm45
    %vm50 = vmand %vm42, %vm46
    %vm51 = vmand %vm43, %vm47
    %vm52 = vmand %vm44, %vm48
    %vm53 = vcmp.ge.s32.totalorder %v40, 0
    %vm54 = vmand %vm49, %vm53
    %vm55 = vmand %vm50, %vm53
    %vm56 = vmand %vm51, %vm53
    %vm57 = vmand %vm52, %vm53
    %vm58 = vcmp.lt.s32.totalorder %v40, 8
    %vm59 = vmand %vm54, %vm58
    %vm60 = vmand %vm55, %vm58
    %vm61 = vmand %vm56, %vm58
    %vm62 = vmand %vm57, %vm58
    %vm63 = vmand %vm53, %vm58
    %vm64 = vcmp.ge.s32.totalorder %v35, %v40
    %vm65 = vmand %vm63, %vm64
    %vm66 = vcmp.ge.s32.totalorder %v35, 8
    %vm67 = vcmp.ge.s32.totalorder %v36, 8
    %vm68 = vcmp.ge.s32.totalorder %v37, 8
    %vm69 = vcmp.ge.s32.totalorder %v38, 8
    %vm70 = vcmp.lt.s32.totalorder %v35, 16
    %vm71 = vcmp.lt.s32.totalorder %v36, 16
    %vm72 = vcmp.lt.s32.totalorder %v37, 16
    %vm73 = vcmp.lt.s32.totalorder %v38, 16
    %vm74 = vmand %vm66, %vm70
    %vm75 = vmand %vm67, %vm71
    %vm76 = vmand %vm68, %vm72
    %vm77 = vmand %vm69, %vm73
    %vm78 = vcmp.ge.s32.totalorder %v40, 8
    %vm79 = vmand %vm74, %vm78
    %vm80 = vmand %vm75, %vm78
    %vm81 = vmand %vm76, %vm78
    %vm82 = vmand %vm77, %vm78
    %vm83 = vcmp.lt.s32.totalorder %v40, 16
    %vm84 = vmand %vm79, %vm83
    %vm85 = vmand %vm80, %vm83
    %vm86 = vmand %vm81, %vm83
    %vm87 = vmand %vm82, %vm83
    %vm88 = vmand %vm78, %vm83
    %v89 = vsub.s32 %v40, 8
    %vm90 = vcmp.ge.s32.totalorder %v35, %v89
    %vm91 = vmand %vm88, %vm90
    %vm92 = vmor %vm59, %vm84
    %vm93 = vmor %vm60, %vm85
    %vm94 = vmor %vm61, %vm86
    %vm95 = vmor %vm62, %vm87
    %vm96 = vmor %vm65, %vm91
    %vm97 = vcmp.ge.s32.totalorder %v35, 16
    %vm98 = vcmp.ge.s32.totalorder %v36, 16
    %vm99 = vcmp.ge.s32.totalorder %v37, 16
    %vm100 = vcmp.ge.s32.totalorder %v38, 16
    %vm101 = vcmp.lt.s32.totalorder %v35, 24
    %vm102 = vcmp.lt.s32.totalorder %v36, 24
    %vm103 = vcmp.lt.s32.totalorder %v37, 24
    %vm104 = vcmp.lt.s32.totalorder %v38, 24
    %vm105 = vmand %vm97, %vm101
    %vm106 = vmand %vm98, %vm102
    %vm107 = vmand %vm99, %vm103
    %vm108 = vmand %vm100, %vm104
    %vm109 = vcmp.ge.s32.totalorder %v40, 16
    %vm110 = vmand %vm105, %vm109
    %vm111 = vmand %vm106, %vm109
    %vm112 = vmand %vm107, %vm109
    %vm113 = vmand %vm108, %vm109
    %vm114 = vcmp.lt.s32.totalorder %v40, 24
    %vm115 = vmand %vm110, %vm114
    %vm116 = vmand %vm111, %vm114
    %vm117 = vmand %vm112, %vm114
    %vm118 = vmand %vm113, %vm114
    %vm119 = vmand %vm109, %vm114
    %v120 = vsub.s32 %v40, 16
    %vm121 = vcmp.ge.s32.totalorder %v35, %v120
    %vm122 = vmand %vm119, %vm121
    %vm123 = vmor %vm92, %vm115
    %vm124 = vmor %vm93, %vm116
    %vm125 = vmor %vm94, %vm117
    %vm126 = vmor %vm95, %vm118
    %vm127 = vmor %vm96, %vm122
    %vm128 = vcmp.ge.s32.totalorder %v35, 24
    %vm129 = vcmp.ge.s32.totalorder %v36, 24
    %vm130 = vcmp.ge.s32.totalorder %v37, 24
    %vm131 = vcmp.ge.s32.totalorder %v38, 24
    %vm132 = vcmp.lt.s32.totalorder %v35, 32
    %vm133 = vcmp.lt.s32.totalorder %v36, 32
    %vm134 = vcmp.lt.s32.totalorder %v37, 32
    %vm135 = vcmp.lt.s32.totalorder %v38, 32
    %vm136 = vmand %vm128, %vm132
    %vm137 = vmand %vm129, %vm133
    %vm138 = vmand %vm130, %vm134
    %vm139 = vmand %vm131, %vm135
    %vm140 = vcmp.ge.s32.totalorder %v40, 24
    %vm141 = vmand %vm136, %vm140
    %vm142 = vmand %vm137, %vm140
    %vm143 = vmand %vm138, %vm140
    %vm144 = vmand %vm139, %vm140
    %vm145 = vcmp.lt.s32.totalorder %v40, 32
    %vm146 = vmand %vm141, %vm145
    %vm147 = vmand %vm142, %vm145
    %vm148 = vmand %vm143, %vm145
    %vm149 = vmand %vm144, %vm145
    %vm150 = vmand %vm140, %vm145
    %v151 = vsub.s32 %v40, 24
    %vm152 = vcmp.ge.s32.totalorder %v35, %v151
    %vm153 = vmand %vm150, %vm152
    %vm154 = vmor %vm123, %vm146
    %vm155 = vmor %vm124, %vm147
    %vm156 = vmor %vm125, %vm148
    %vm157 = vmor %vm126, %vm149
    %vm158 = vmor %vm127, %vm153
    %v159 = vsel %vm154, 1, 0
    %v160 = vsel %vm155, 1, 0
    %v161 = vsel %vm156, 1, 0
    %v162 = vsel %vm157, 1, 0
    %v163 = vcvt.s32.f32 %v159
    %v164 = vcvt.s32.f32 %v160
    %v165 = vcvt.s32.f32 %v161
    %v166 = vcvt.s32.f32 %v162
    %v167 = vsel %vm158, 1, 0
    %v168 = vcvt.s32.f32 %v167
    %vm169 = vcmask 261120
    %v170 = vsel %vm169, %v21, 0.0
    %171 = vadd.xlane.f32.xlu0 %v170
    %v172 = vpop.xlane.xlu0 %171
    %v173 = vsel %vm169, %v22, 0.0
    %174 = vadd.xlane.f32.xlu0 %v173
    %v175 = vpop.xlane.xlu0 %174
    %v176 = vrcp.pop 32.0
    %v177 = vmul.f32 %v172, %v176
    %v178 = vmul.f32 %v175, %v176
    %v179 = vsub.f32 %v21, %v177
    %v180 = vsub.f32 %v22, %v178
    %v181 = vmul.f32 %v179, %v179
    %v182 = vmul.f32 %v180, %v180
    %v183 = vsel %vm169, %v181, 0.0
    %184 = vadd.xlane.f32.xlu0 %v183
    %v185 = vpop.xlane.xlu0 %184
    %v186 = vsel %vm169, %v182, 0.0
    %187 = vadd.xlane.f32.xlu0 %v186
    %v188 = vpop.xlane.xlu0 %187
    %v189 = vmul.f32 %v185, %v176
    %v190 = vmul.f32 %v188, %v176
    %v191 = vadd.f32 %v189, 1e-05
    %v192 = vadd.f32 %v190, 1e-05
    %v193 = vrsqrt.pop %v191
    %v194 = vrsqrt.pop %v192
    %v195 = vmul.f32 %v179, %v193
    %v196 = vmul.f32 %v180, %v194
    %v197 = vlaneseq
    %v198 = vshrl.u32 %v197, 7
    %v199 = vsub.s32 0, %v198
    %v200 = vrot.slane %v23, %v199
    %v201 = vmul.f32 %v195, %v200
    %v202 = vmul.f32 %v196, %v200
    %v203 = vlaneseq
    %v204 = vshrl.u32 %v203, 7
    %v205 = vsub.s32 0, %v204
    %v206 = vrot.slane %v24, %v205
    %v207 = vadd.f32 %v201, %v206
    %v208 = vadd.f32 %v202, %v206
    %v210 = vsel %vm169, %v207, 0
    %v213 = vsel %vm169, %v208, 0
    %215 = vmatprep.subr.mxu0 0.0
    %216 = vmatpush1.msra.mxu0 0.0
    %217 = vmatprep.subr.mxu0 0.0
    %218 = vmatpush1.msra.mxu0 0.0
    %219 = vmatprep.subr.mxu0 0.0
    %220 = vmatpush1.msra.mxu0 0.0
    %221 = vmatprep.subr.mxu0 0.0
    %222 = vmatpush1.msra.mxu0 0.0
    %223 = vmatprep.subr.mxu0 0.0
    %224 = vmatpush1.msra.mxu0 0.0
    %225 = vmatprep.subr.mxu0 0.0
    %226 = vmatpush1.msra.mxu0 0.0
    %227 = vmatprep.subr.mxu0 0.0
    %228 = vmatpush1.msra.mxu0 0.0
    %229 = vmatprep.subr.mxu0 0.0
    %230 = vmatpush1.msra.mxu0 0.0
    %231 = vmatprep.subr.mxu0 0.0
    %232 = vmatpush1.msra.mxu0 0.0
    %233 = vmatprep.subr.mxu0 0.0
    %234 = vmatpush1.msra.mxu0 0.0
    %235 = vmatprep.subr.mxu0 0.0
    %236 = vmatpush1.msra.mxu0 0.0
    %237 = vmatprep.subr.mxu0 0.0
    %238 = vmatpush1.msra.mxu0 0.0
    %239 = vmatprep.subr.mxu0 0.0
    %240 = vmatpush1.msra.mxu0 %v33
    %241 = vmatprep.subr.mxu0 0.0
    %242 = vmatpush1.msra.mxu0 %v32
    %243 = vmatprep.subr.mxu0 0.0
    %244 = vmatpush1.msra.mxu0 %v31
    %245 = vmatprep.subr.mxu0 0.0
    %246 = vmatpush1.msra.mxu0 %v30
    %247 = vmatprep.subr.mxu0 0.0
    %248 = vmatpush2.msra.mxu0 0.0
    %249 = vmatprep.subr.mxu0 0.0
    %250 = vmatpush2.msra.mxu0 0.0
    %251 = vmatprep.subr.mxu0 0.0
    %252 = vmatpush2.msra.mxu0 0.0
    %253 = vmatprep.subr.mxu0 0.0
    %254 = vmatpush2.msra.mxu0 0.0
    %255 = vmatprep.subr.mxu0 0.0
    %256 = vmatpush2.msra.mxu0 0.0
    %257 = vmatprep.subr.mxu0 0.0
    %258 = vmatpush2.msra.mxu0 0.0
    %259 = vmatprep.subr.mxu0 0.0
    %260 = vmatpush2.msra.mxu0 0.0
    %261 = vmatprep.subr.mxu0 0.0
    %262 = vmatpush2.msra.mxu0 0.0
    %263 = vmatprep.subr.mxu0 0.0
    %264 = vmatpush2.msra.mxu0 0.0
    %265 = vmatprep.subr.mxu0 0.0
    %266 = vmatpush2.msra.mxu0 0.0
    %267 = vmatprep.subr.mxu0 0.0
    %268 = vmatpush2.msra.mxu0 0.0
    %269 = vmatprep.subr.mxu0 0.0
    %270 = vmatpush2.msra.mxu0 0.0
    %271 = vmatprep.subr.mxu0 0.0
    %272 = vmatpush2.msra.mxu0 0.0
    %273 = vmatprep.subr.mxu0 0.0
    %274 = vmatpush2.msra.mxu0 0.0
    %275 = vmatprep.subr.mxu0 0.0
    %276 = vmatpush2.msra.mxu0 0.0
    %277 = vmatprep.subr.mxu0 0.0
    %278 = vmatpush2.msra.mxu0 0.0
    %279 = vmatprep.mubr.f32.mxu0 0.0
    %280 = vmatmul.mubr.f32.gmra.mxu0 %v210
    %v281 = vpop.f32.mrf.mxu0
    %v282 = vadd.f32 0.0, %v281
    %v283 = vpop.f32.mrf.mxu0
    %284 = vmatprep.mubr.f32.mxu0 0.0
    %285 = vmatmul.mubr.f32.gmra.mxu0 %v213
    %v286 = vpop.f32.mrf.mxu0
    %v287 = vadd.f32 0.0, %v286
    %v288 = vpop.f32.mrf.mxu0
    %289 = vdwg.mxu0
    %294 = vrot.lane.b32.xlu0 %v30, 96
    %v295 = vpop.permute.xlu0 %294
    %296 = vrot.lane.b32.xlu0 %v31, 96
    %v297 = vpop.permute.xlu0 %296
    %298 = vrot.lane.b32.xlu0 %v32, 96
    %v299 = vpop.permute.xlu0 %298
    %300 = vrot.lane.b32.xlu0 %v33, 96
    %v301 = vpop.permute.xlu0 %300
    %306 = vmatprep.subr.mxu0 0.0
    %307 = vmatpush1.msra.mxu0 0.0
    %308 = vmatprep.subr.mxu0 0.0
    %309 = vmatpush1.msra.mxu0 0.0
    %310 = vmatprep.subr.mxu0 0.0
    %311 = vmatpush1.msra.mxu0 0.0
    %312 = vmatprep.subr.mxu0 0.0
    %313 = vmatpush1.msra.mxu0 0.0
    %314 = vmatprep.subr.mxu0 0.0
    %315 = vmatpush1.msra.mxu0 0.0
    %316 = vmatprep.subr.mxu0 0.0
    %317 = vmatpush1.msra.mxu0 0.0
    %318 = vmatprep.subr.mxu0 0.0
    %319 = vmatpush1.msra.mxu0 0.0
    %320 = vmatprep.subr.mxu0 0.0
    %321 = vmatpush1.msra.mxu0 0.0
    %322 = vmatprep.subr.mxu0 0.0
    %323 = vmatpush1.msra.mxu0 0.0
    %324 = vmatprep.subr.mxu0 0.0
    %325 = vmatpush1.msra.mxu0 0.0
    %326 = vmatprep.subr.mxu0 0.0
    %327 = vmatpush1.msra.mxu0 0.0
    %328 = vmatprep.subr.mxu0 0.0
    %329 = vmatpush1.msra.mxu0 0.0
    %330 = vmatprep.subr.mxu0 0.0
    %331 = vmatpush1.msra.mxu0 %v301
    %332 = vmatprep.subr.mxu0 0.0
    %333 = vmatpush1.msra.mxu0 %v299
    %334 = vmatprep.subr.mxu0 0.0
    %335 = vmatpush1.msra.mxu0 %v297
    %336 = vmatprep.subr.mxu0 0.0
    %337 = vmatpush1.msra.mxu0 %v295
    %338 = vmatprep.subr.mxu0 0.0
    %339 = vmatpush2.msra.mxu0 0.0
    %340 = vmatprep.subr.mxu0 0.0
    %341 = vmatpush2.msra.mxu0 0.0
    %342 = vmatprep.subr.mxu0 0.0
    %343 = vmatpush2.msra.mxu0 0.0
    %344 = vmatprep.subr.mxu0 0.0
    %345 = vmatpush2.msra.mxu0 0.0
    %346 = vmatprep.subr.mxu0 0.0
    %347 = vmatpush2.msra.mxu0 0.0
    %348 = vmatprep.subr.mxu0 0.0
    %349 = vmatpush2.msra.mxu0 0.0
    %350 = vmatprep.subr.mxu0 0.0
    %351 = vmatpush2.msra.mxu0 0.0
    %352 = vmatprep.subr.mxu0 0.0
    %353 = vmatpush2.msra.mxu0 0.0
    %354 = vmatprep.subr.mxu0 0.0
    %355 = vmatpush2.msra.mxu0 0.0
    %356 = vmatprep.subr.mxu0 0.0
    %357 = vmatpush2.msra.mxu0 0.0
    %358 = vmatprep.subr.mxu0 0.0
    %359 = vmatpush2.msra.mxu0 0.0
    %360 = vmatprep.subr.mxu0 0.0
    %361 = vmatpush2.msra.mxu0 0.0
    %362 = vmatprep.subr.mxu0 0.0
    %363 = vmatpush2.msra.mxu0 0.0
    %364 = vmatprep.subr.mxu0 0.0
    %365 = vmatpush2.msra.mxu0 0.0
    %366 = vmatprep.subr.mxu0 0.0
    %367 = vmatpush2.msra.mxu0 0.0
    %368 = vmatprep.subr.mxu0 0.0
    %369 = vmatpush2.msra.mxu0 0.0
    %370 = vmatprep.mubr.f32.mxu0 0.0
    %371 = vmatmul.mubr.f32.gmra.mxu0 %v210
    %v372 = vpop.f32.mrf.mxu0
    %v373 = vadd.f32 0.0, %v372
    %v374 = vpop.f32.mrf.mxu0
    %375 = vmatprep.mubr.f32.mxu0 0.0
    %376 = vmatmul.mubr.f32.gmra.mxu0 %v213
    %v377 = vpop.f32.mrf.mxu0
    %v378 = vadd.f32 0.0, %v377
    %v379 = vpop.f32.mrf.mxu0
    %380 = vdwg.mxu0
    %381 = vrot.lane.b32.xlu0 %v30, 64
    %v382 = vpop.permute.xlu0 %381
    %383 = vrot.lane.b32.xlu0 %v31, 64
    %v384 = vpop.permute.xlu0 %383
    %385 = vrot.lane.b32.xlu0 %v32, 64
    %v386 = vpop.permute.xlu0 %385
    %387 = vrot.lane.b32.xlu0 %v33, 64
    %v388 = vpop.permute.xlu0 %387
    %393 = vmatprep.subr.mxu0 0.0
    %394 = vmatpush1.msra.mxu0 0.0
    %395 = vmatprep.subr.mxu0 0.0
    %396 = vmatpush1.msra.mxu0 0.0
    %397 = vmatprep.subr.mxu0 0.0
    %398 = vmatpush1.msra.mxu0 0.0
    %399 = vmatprep.subr.mxu0 0.0
    %400 = vmatpush1.msra.mxu0 0.0
    %401 = vmatprep.subr.mxu0 0.0
    %402 = vmatpush1.msra.mxu0 0.0
    %403 = vmatprep.subr.mxu0 0.0
    %404 = vmatpush1.msra.mxu0 0.0
    %405 = vmatprep.subr.mxu0 0.0
    %406 = vmatpush1.msra.mxu0 0.0
    %407 = vmatprep.subr.mxu0 0.0
    %408 = vmatpush1.msra.mxu0 0.0
    %409 = vmatprep.subr.mxu0 0.0
    %410 = vmatpush1.msra.mxu0 0.0
    %411 = vmatprep.subr.mxu0 0.0
    %412 = vmatpush1.msra.mxu0 0.0
    %413 = vmatprep.subr.mxu0 0.0
    %414 = vmatpush1.msra.mxu0 0.0
    %415 = vmatprep.subr.mxu0 0.0
    %416 = vmatpush1.msra.mxu0 0.0
    %417 = vmatprep.subr.mxu0 0.0
    %418 = vmatpush1.msra.mxu0 %v388
    %419 = vmatprep.subr.mxu0 0.0
    %420 = vmatpush1.msra.mxu0 %v386
    %421 = vmatprep.subr.mxu0 0.0
    %422 = vmatpush1.msra.mxu0 %v384
    %423 = vmatprep.subr.mxu0 0.0
    %424 = vmatpush1.msra.mxu0 %v382
    %425 = vmatprep.subr.mxu0 0.0
    %426 = vmatpush2.msra.mxu0 0.0
    %427 = vmatprep.subr.mxu0 0.0
    %428 = vmatpush2.msra.mxu0 0.0
    %429 = vmatprep.subr.mxu0 0.0
    %430 = vmatpush2.msra.mxu0 0.0
    %431 = vmatprep.subr.mxu0 0.0
    %432 = vmatpush2.msra.mxu0 0.0
    %433 = vmatprep.subr.mxu0 0.0
    %434 = vmatpush2.msra.mxu0 0.0
    %435 = vmatprep.subr.mxu0 0.0
    %436 = vmatpush2.msra.mxu0 0.0
    %437 = vmatprep.subr.mxu0 0.0
    %438 = vmatpush2.msra.mxu0 0.0
    %439 = vmatprep.subr.mxu0 0.0
    %440 = vmatpush2.msra.mxu0 0.0
    %441 = vmatprep.subr.mxu0 0.0
    %442 = vmatpush2.msra.mxu0 0.0
    %443 = vmatprep.subr.mxu0 0.0
    %444 = vmatpush2.msra.mxu0 0.0
    %445 = vmatprep.subr.mxu0 0.0
    %446 = vmatpush2.msra.mxu0 0.0
    %447 = vmatprep.subr.mxu0 0.0
    %448 = vmatpush2.msra.mxu0 0.0
    %449 = vmatprep.subr.mxu0 0.0
    %450 = vmatpush2.msra.mxu0 0.0
    %451 = vmatprep.subr.mxu0 0.0
    %452 = vmatpush2.msra.mxu0 0.0
    %453 = vmatprep.subr.mxu0 0.0
    %454 = vmatpush2.msra.mxu0 0.0
    %455 = vmatprep.subr.mxu0 0.0
    %456 = vmatpush2.msra.mxu0 0.0
    %457 = vmatprep.mubr.f32.mxu0 0.0
    %458 = vmatmul.mubr.f32.gmra.mxu0 %v210
    %v459 = vpop.f32.mrf.mxu0
    %v460 = vadd.f32 0.0, %v459
    %v461 = vpop.f32.mrf.mxu0
    %462 = vmatprep.mubr.f32.mxu0 0.0
    %463 = vmatmul.mubr.f32.gmra.mxu0 %v213
    %v464 = vpop.f32.mrf.mxu0
    %v465 = vadd.f32 0.0, %v464
    %v466 = vpop.f32.mrf.mxu0
    %467 = vdwg.mxu0
    %v468 = vmul.f32 %v373, %v163
    %v469 = vmul.f32 %v373, %v164
    %v470 = vmul.f32 %v373, %v165
    %v471 = vmul.f32 %v373, %v166
    %v472 = vmul.f32 %v378, %v163
    %v473 = vmul.f32 %v378, %v164
    %v474 = vmul.f32 %v378, %v165
    %v475 = vmul.f32 %v378, %v166
    %v476 = vmul.f32 %v460, %v163
    %v477 = vmul.f32 %v460, %v164
    %v478 = vmul.f32 %v460, %v165
    %v479 = vmul.f32 %v460, %v166
    %v480 = vmul.f32 %v465, %v163
    %v481 = vmul.f32 %v465, %v164
    %v482 = vmul.f32 %v465, %v165
    %v483 = vmul.f32 %v465, %v166
    %v485 = vsel %vm169, %v282, 0
    %v488 = vsel %vm169, %v468, 0
    %v491 = vsel %vm169, %v469, 0
    %v494 = vsel %vm169, %v470, 0
    %v497 = vsel %vm169, %v471, 0
    %499 = vmatprep.subr.mxu0 0.0
    %500 = vmatpush1.xpose.msra.mxu0 0.0
    %501 = vmatprep.subr.mxu0 0.0
    %502 = vmatpush1.xpose.msra.mxu0 0.0
    %503 = vmatprep.subr.mxu0 0.0
    %504 = vmatpush1.xpose.msra.mxu0 0.0
    %505 = vmatprep.subr.mxu0 0.0
    %506 = vmatpush1.xpose.msra.mxu0 0.0
    %507 = vmatprep.subr.mxu0 0.0
    %508 = vmatpush1.xpose.msra.mxu0 0.0
    %509 = vmatprep.subr.mxu0 0.0
    %510 = vmatpush1.xpose.msra.mxu0 0.0
    %511 = vmatprep.subr.mxu0 0.0
    %512 = vmatpush1.xpose.msra.mxu0 0.0
    %513 = vmatprep.subr.mxu0 0.0
    %514 = vmatpush1.xpose.msra.mxu0 0.0
    %515 = vmatprep.subr.mxu0 0.0
    %516 = vmatpush1.xpose.msra.mxu0 0.0
    %517 = vmatprep.subr.mxu0 0.0
    %518 = vmatpush1.xpose.msra.mxu0 0.0
    %519 = vmatprep.subr.mxu0 0.0
    %520 = vmatpush1.xpose.msra.mxu0 0.0
    %521 = vmatprep.subr.mxu0 0.0
    %522 = vmatpush1.xpose.msra.mxu0 0.0
    %523 = vmatprep.subr.mxu0 0.0
    %524 = vmatpush1.xpose.msra.mxu0 %v497
    %525 = vmatprep.subr.mxu0 0.0
    %526 = vmatpush1.xpose.msra.mxu0 %v494
    %527 = vmatprep.subr.mxu0 0.0
    %528 = vmatpush1.xpose.msra.mxu0 %v491
    %529 = vmatprep.subr.mxu0 0.0
    %530 = vmatpush1.xpose.msra.mxu0 %v488
    %531 = vmatprep.subr.mxu0 0.0
    %532 = vmatpush2.xpose.msra.mxu0 0.0
    %533 = vmatprep.subr.mxu0 0.0
    %534 = vmatpush2.xpose.msra.mxu0 0.0
    %535 = vmatprep.subr.mxu0 0.0
    %536 = vmatpush2.xpose.msra.mxu0 0.0
    %537 = vmatprep.subr.mxu0 0.0
    %538 = vmatpush2.xpose.msra.mxu0 0.0
    %539 = vmatprep.subr.mxu0 0.0
    %540 = vmatpush2.xpose.msra.mxu0 0.0
    %541 = vmatprep.subr.mxu0 0.0
    %542 = vmatpush2.xpose.msra.mxu0 0.0
    %543 = vmatprep.subr.mxu0 0.0
    %544 = vmatpush2.xpose.msra.mxu0 0.0
    %545 = vmatprep.subr.mxu0 0.0
    %546 = vmatpush2.xpose.msra.mxu0 0.0
    %547 = vmatprep.subr.mxu0 0.0
    %548 = vmatpush2.xpose.msra.mxu0 0.0
    %549 = vmatprep.subr.mxu0 0.0
    %550 = vmatpush2.xpose.msra.mxu0 0.0
    %551 = vmatprep.subr.mxu0 0.0
    %552 = vmatpush2.xpose.msra.mxu0 0.0
    %553 = vmatprep.subr.mxu0 0.0
    %554 = vmatpush2.xpose.msra.mxu0 0.0
    %555 = vmatprep.subr.mxu0 0.0
    %556 = vmatpush2.xpose.msra.mxu0 0.0
    %557 = vmatprep.subr.mxu0 0.0
    %558 = vmatpush2.xpose.msra.mxu0 0.0
    %559 = vmatprep.subr.mxu0 0.0
    %560 = vmatpush2.xpose.msra.mxu0 0.0
    %561 = vmatprep.subr.mxu0 0.0
    %562 = vmatpush2.xpose.msra.mxu0 0.0
    %563 = vmatprep.mubr.f32.mxu0 0.0
    %564 = vmatmul.mubr.f32.gmra.mxu0 %v485
    %v565 = vpop.f32.mrf.mxu0
    %v566 = vadd.f32 0.0, %v565
    %v567 = vpop.f32.mrf.mxu0
    %568 = vdwg.mxu0
    %v570 = vsel %vm169, %v287, 0
    %v573 = vsel %vm169, %v472, 0
    %v576 = vsel %vm169, %v473, 0
    %v579 = vsel %vm169, %v474, 0
    %v582 = vsel %vm169, %v475, 0
    %584 = vmatprep.subr.mxu0 0.0
    %585 = vmatpush1.xpose.msra.mxu0 0.0
    %586 = vmatprep.subr.mxu0 0.0
    %587 = vmatpush1.xpose.msra.mxu0 0.0
    %588 = vmatprep.subr.mxu0 0.0
    %589 = vmatpush1.xpose.msra.mxu0 0.0
    %590 = vmatprep.subr.mxu0 0.0
    %591 = vmatpush1.xpose.msra.mxu0 0.0
    %592 = vmatprep.subr.mxu0 0.0
    %593 = vmatpush1.xpose.msra.mxu0 0.0
    %594 = vmatprep.subr.mxu0 0.0
    %595 = vmatpush1.xpose.msra.mxu0 0.0
    %596 = vmatprep.subr.mxu0 0.0
    %597 = vmatpush1.xpose.msra.mxu0 0.0
    %598 = vmatprep.subr.mxu0 0.0
    %599 = vmatpush1.xpose.msra.mxu0 0.0
    %600 = vmatprep.subr.mxu0 0.0
    %601 = vmatpush1.xpose.msra.mxu0 0.0
    %602 = vmatprep.subr.mxu0 0.0
    %603 = vmatpush1.xpose.msra.mxu0 0.0
    %604 = vmatprep.subr.mxu0 0.0
    %605 = vmatpush1.xpose.msra.mxu0 0.0
    %606 = vmatprep.subr.mxu0 0.0
    %607 = vmatpush1.xpose.msra.mxu0 0.0
    %608 = vmatprep.subr.mxu0 0.0
    %609 = vmatpush1.xpose.msra.mxu0 %v582
    %610 = vmatprep.subr.mxu0 0.0
    %611 = vmatpush1.xpose.msra.mxu0 %v579
    %612 = vmatprep.subr.mxu0 0.0
    %613 = vmatpush1.xpose.msra.mxu0 %v576
    %614 = vmatprep.subr.mxu0 0.0
    %615 = vmatpush1.xpose.msra.mxu0 %v573
    %616 = vmatprep.subr.mxu0 0.0
    %617 = vmatpush2.xpose.msra.mxu0 0.0
    %618 = vmatprep.subr.mxu0 0.0
    %619 = vmatpush2.xpose.msra.mxu0 0.0
    %620 = vmatprep.subr.mxu0 0.0
    %621 = vmatpush2.xpose.msra.mxu0 0.0
    %622 = vmatprep.subr.mxu0 0.0
    %623 = vmatpush2.xpose.msra.mxu0 0.0
    %624 = vmatprep.subr.mxu0 0.0
    %625 = vmatpush2.xpose.msra.mxu0 0.0
    %626 = vmatprep.subr.mxu0 0.0
    %627 = vmatpush2.xpose.msra.mxu0 0.0
    %628 = vmatprep.subr.mxu0 0.0
    %629 = vmatpush2.xpose.msra.mxu0 0.0
    %630 = vmatprep.subr.mxu0 0.0
    %631 = vmatpush2.xpose.msra.mxu0 0.0
    %632 = vmatprep.subr.mxu0 0.0
    %633 = vmatpush2.xpose.msra.mxu0 0.0
    %634 = vmatprep.subr.mxu0 0.0
    %635 = vmatpush2.xpose.msra.mxu0 0.0
    %636 = vmatprep.subr.mxu0 0.0
    %637 = vmatpush2.xpose.msra.mxu0 0.0
    %638 = vmatprep.subr.mxu0 0.0
    %639 = vmatpush2.xpose.msra.mxu0 0.0
    %640 = vmatprep.subr.mxu0 0.0
    %641 = vmatpush2.xpose.msra.mxu0 0.0
    %642 = vmatprep.subr.mxu0 0.0
    %643 = vmatpush2.xpose.msra.mxu0 0.0
    %644 = vmatprep.subr.mxu0 0.0
    %645 = vmatpush2.xpose.msra.mxu0 0.0
    %646 = vmatprep.subr.mxu0 0.0
    %647 = vmatpush2.xpose.msra.mxu0 0.0
    %648 = vmatprep.mubr.f32.mxu0 0.0
    %649 = vmatmul.mubr.f32.gmra.mxu0 %v570
    %v650 = vpop.f32.mrf.mxu0
    %v651 = vadd.f32 0.0, %v650
    %v652 = vpop.f32.mrf.mxu0
    %653 = vdwg.mxu0
    %v654 = vmul.f32 %v566, 0.17677669
    %v655 = vmul.f32 %v651, 0.17677669
    %v656 = vsel %vm169, %v654, -inf
    %657 = vmax.xlane.f32.xlu0 %v656
    %v658 = vpop.xlane.xlu0 %657
    %v659 = vsel %vm169, %v655, -inf
    %660 = vmax.xlane.f32.xlu0 %v659
    %v661 = vpop.xlane.xlu0 %660
    %v662 = vsub.f32 %v654, %v658
    %v663 = vsub.f32 %v655, %v661
    %v664 = vmul.f32 %v662, 1.442695
    %v665 = vpow.pop %v664
    %v666 = vmul.f32 %v663, 1.442695
    %v667 = vpow.pop %v666
    %v668 = vmul.f32 %v665, %v168
    %v669 = vmul.f32 %v667, %v168
    %v671 = vsel %vm169, %v668, 0
    %v674 = vsel %vm169, %v669, 0
    %676 = vmatprep.subr.mxu0 0.0
    %677 = vmatpush1.msra.mxu0 0.0
    %678 = vmatprep.subr.mxu0 0.0
    %679 = vmatpush1.msra.mxu0 0.0
    %680 = vmatprep.subr.mxu0 0.0
    %681 = vmatpush1.msra.mxu0 0.0
    %682 = vmatprep.subr.mxu0 0.0
    %683 = vmatpush1.msra.mxu0 0.0
    %684 = vmatprep.subr.mxu0 0.0
    %685 = vmatpush1.msra.mxu0 0.0
    %686 = vmatprep.subr.mxu0 0.0
    %687 = vmatpush1.msra.mxu0 0.0
    %688 = vmatprep.subr.mxu0 0.0
    %689 = vmatpush1.msra.mxu0 0.0
    %690 = vmatprep.subr.mxu0 0.0
    %691 = vmatpush1.msra.mxu0 0.0
    %692 = vmatprep.subr.mxu0 0.0
    %693 = vmatpush1.msra.mxu0 0.0
    %694 = vmatprep.subr.mxu0 0.0
    %695 = vmatpush1.msra.mxu0 0.0
    %696 = vmatprep.subr.mxu0 0.0
    %697 = vmatpush1.msra.mxu0 0.0
    %698 = vmatprep.subr.mxu0 0.0
    %699 = vmatpush1.msra.mxu0 0.0
    %700 = vmatprep.subr.mxu0 0.0
    %701 = vmatpush1.msra.mxu0 %v166
    %702 = vmatprep.subr.mxu0 0.0
    %703 = vmatpush1.msra.mxu0 %v165
    %704 = vmatprep.subr.mxu0 0.0
    %705 = vmatpush1.msra.mxu0 %v164
    %706 = vmatprep.subr.mxu0 0.0
    %707 = vmatpush1.msra.mxu0 %v163
    %708 = vmatprep.subr.mxu0 0.0
    %709 = vmatpush2.msra.mxu0 0.0
    %710 = vmatprep.subr.mxu0 0.0
    %711 = vmatpush2.msra.mxu0 0.0
    %712 = vmatprep.subr.mxu0 0.0
    %713 = vmatpush2.msra.mxu0 0.0
    %714 = vmatprep.subr.mxu0 0.0
    %715 = vmatpush2.msra.mxu0 0.0
    %716 = vmatprep.subr.mxu0 0.0
    %717 = vmatpush2.msra.mxu0 0.0
    %718 = vmatprep.subr.mxu0 0.0
    %719 = vmatpush2.msra.mxu0 0.0
    %720 = vmatprep.subr.mxu0 0.0
    %721 = vmatpush2.msra.mxu0 0.0
    %722 = vmatprep.subr.mxu0 0.0
    %723 = vmatpush2.msra.mxu0 0.0
    %724 = vmatprep.subr.mxu0 0.0
    %725 = vmatpush2.msra.mxu0 0.0
    %726 = vmatprep.subr.mxu0 0.0
    %727 = vmatpush2.msra.mxu0 0.0
    %728 = vmatprep.subr.mxu0 0.0
    %729 = vmatpush2.msra.mxu0 0.0
    %730 = vmatprep.subr.mxu0 0.0
    %731 = vmatpush2.msra.mxu0 0.0
    %732 = vmatprep.subr.mxu0 0.0
    %733 = vmatpush2.msra.mxu0 0.0
    %734 = vmatprep.subr.mxu0 0.0
    %735 = vmatpush2.msra.mxu0 0.0
    %736 = vmatprep.subr.mxu0 0.0
    %737 = vmatpush2.msra.mxu0 0.0
    %738 = vmatprep.subr.mxu0 0.0
    %739 = vmatpush2.msra.mxu0 0.0
    %740 = vmatprep.mubr.f32.mxu0 0.0
    %741 = vmatmul.mubr.f32.gmra.mxu0 %v671
    %v742 = vpop.f32.mrf.mxu0
    %v743 = vadd.f32 0.0, %v742
    %v744 = vpop.f32.mrf.mxu0
    %745 = vmatprep.mubr.f32.mxu0 0.0
    %746 = vmatmul.mubr.f32.gmra.mxu0 %v674
    %v747 = vpop.f32.mrf.mxu0
    %v748 = vadd.f32 0.0, %v747
    %v749 = vpop.f32.mrf.mxu0
    %750 = vdwg.mxu0
    %v751 = vrcp.pop %v743
    %v752 = vrcp.pop %v748
    %v753 = vmul.f32 %v668, %v751
    %v754 = vmul.f32 %v669, %v752
    %v756 = vsel %vm169, %v753, 0
    %758 = vmatprep.subr.mxu0 0.0
    %759 = vmatpush1.msra.mxu0 0.0
    %760 = vmatprep.subr.mxu0 0.0
    %761 = vmatpush1.msra.mxu0 0.0
    %762 = vmatprep.subr.mxu0 0.0
    %763 = vmatpush1.msra.mxu0 0.0
    %764 = vmatprep.subr.mxu0 0.0
    %765 = vmatpush1.msra.mxu0 0.0
    %766 = vmatprep.subr.mxu0 0.0
    %767 = vmatpush1.msra.mxu0 0.0
    %768 = vmatprep.subr.mxu0 0.0
    %769 = vmatpush1.msra.mxu0 0.0
    %770 = vmatprep.subr.mxu0 0.0
    %771 = vmatpush1.msra.mxu0 0.0
    %772 = vmatprep.subr.mxu0 0.0
    %773 = vmatpush1.msra.mxu0 0.0
    %774 = vmatprep.subr.mxu0 0.0
    %775 = vmatpush1.msra.mxu0 0.0
    %776 = vmatprep.subr.mxu0 0.0
    %777 = vmatpush1.msra.mxu0 0.0
    %778 = vmatprep.subr.mxu0 0.0
    %779 = vmatpush1.msra.mxu0 0.0
    %780 = vmatprep.subr.mxu0 0.0
    %781 = vmatpush1.msra.mxu0 0.0
    %782 = vmatprep.subr.mxu0 0.0
    %783 = vmatpush1.msra.mxu0 %v479
    %784 = vmatprep.subr.mxu0 0.0
    %785 = vmatpush1.msra.mxu0 %v478
    %786 = vmatprep.subr.mxu0 0.0
    %787 = vmatpush1.msra.mxu0 %v477
    %788 = vmatprep.subr.mxu0 0.0
    %789 = vmatpush1.msra.mxu0 %v476
    %790 = vmatprep.subr.mxu0 0.0
    %791 = vmatpush2.msra.mxu0 0.0
    %792 = vmatprep.subr.mxu0 0.0
    %793 = vmatpush2.msra.mxu0 0.0
    %794 = vmatprep.subr.mxu0 0.0
    %795 = vmatpush2.msra.mxu0 0.0
    %796 = vmatprep.subr.mxu0 0.0
    %797 = vmatpush2.msra.mxu0 0.0
    %798 = vmatprep.subr.mxu0 0.0
    %799 = vmatpush2.msra.mxu0 0.0
    %800 = vmatprep.subr.mxu0 0.0
    %801 = vmatpush2.msra.mxu0 0.0
    %802 = vmatprep.subr.mxu0 0.0
    %803 = vmatpush2.msra.mxu0 0.0
    %804 = vmatprep.subr.mxu0 0.0
    %805 = vmatpush2.msra.mxu0 0.0
    %806 = vmatprep.subr.mxu0 0.0
    %807 = vmatpush2.msra.mxu0 0.0
    %808 = vmatprep.subr.mxu0 0.0
    %809 = vmatpush2.msra.mxu0 0.0
    %810 = vmatprep.subr.mxu0 0.0
    %811 = vmatpush2.msra.mxu0 0.0
    %812 = vmatprep.subr.mxu0 0.0
    %813 = vmatpush2.msra.mxu0 0.0
    %814 = vmatprep.subr.mxu0 0.0
    %815 = vmatpush2.msra.mxu0 0.0
    %816 = vmatprep.subr.mxu0 0.0
    %817 = vmatpush2.msra.mxu0 0.0
    %818 = vmatprep.subr.mxu0 0.0
    %819 = vmatpush2.msra.mxu0 0.0
    %820 = vmatprep.subr.mxu0 0.0
    %821 = vmatpush2.msra.mxu0 0.0
    %822 = vmatprep.mubr.f32.mxu0 0.0
    %823 = vmatmul.mubr.f32.gmra.mxu0 %v756
    %v824 = vpop.f32.mrf.mxu0
    %v825 = vadd.f32 0.0, %v824
    %v826 = vpop.f32.mrf.mxu0
    %827 = vdwg.mxu0
    %v829 = vsel %vm169, %v754, 0
    %831 = vmatprep.subr.mxu0 0.0
    %832 = vmatpush1.msra.mxu0 0.0
    %833 = vmatprep.subr.mxu0 0.0
    %834 = vmatpush1.msra.mxu0 0.0
    %835 = vmatprep.subr.mxu0 0.0
    %836 = vmatpush1.msra.mxu0 0.0
    %837 = vmatprep.subr.mxu0 0.0
    %838 = vmatpush1.msra.mxu0 0.0
    %839 = vmatprep.subr.mxu0 0.0
    %840 = vmatpush1.msra.mxu0 0.0
    %841 = vmatprep.subr.mxu0 0.0
    %842 = vmatpush1.msra.mxu0 0.0
    %843 = vmatprep.subr.mxu0 0.0
    %844 = vmatpush1.msra.mxu0 0.0
    %845 = vmatprep.subr.mxu0 0.0
    %846 = vmatpush1.msra.mxu0 0.0
    %847 = vmatprep.subr.mxu0 0.0
    %848 = vmatpush1.msra.mxu0 0.0
    %849 = vmatprep.subr.mxu0 0.0
    %850 = vmatpush1.msra.mxu0 0.0
    %851 = vmatprep.subr.mxu0 0.0
    %852 = vmatpush1.msra.mxu0 0.0
    %853 = vmatprep.subr.mxu0 0.0
    %854 = vmatpush1.msra.mxu0 0.0
    %855 = vmatprep.subr.mxu0 0.0
    %856 = vmatpush1.msra.mxu0 %v483
    %857 = vmatprep.subr.mxu0 0.0
    %858 = vmatpush1.msra.mxu0 %v482
    %859 = vmatprep.subr.mxu0 0.0
    %860 = vmatpush1.msra.mxu0 %v481
    %861 = vmatprep.subr.mxu0 0.0
    %862 = vmatpush1.msra.mxu0 %v480
    %863 = vmatprep.subr.mxu0 0.0
    %864 = vmatpush2.msra.mxu0 0.0
    %865 = vmatprep.subr.mxu0 0.0
    %866 = vmatpush2.msra.mxu0 0.0
    %867 = vmatprep.subr.mxu0 0.0
    %868 = vmatpush2.msra.mxu0 0.0
    %869 = vmatprep.subr.mxu0 0.0
    %870 = vmatpush2.msra.mxu0 0.0
    %871 = vmatprep.subr.mxu0 0.0
    %872 = vmatpush2.msra.mxu0 0.0
    %873 = vmatprep.subr.mxu0 0.0
    %874 = vmatpush2.msra.mxu0 0.0
    %875 = vmatprep.subr.mxu0 0.0
    %876 = vmatpush2.msra.mxu0 0.0
    %877 = vmatprep.subr.mxu0 0.0
    %878 = vmatpush2.msra.mxu0 0.0
    %879 = vmatprep.subr.mxu0 0.0
    %880 = vmatpush2.msra.mxu0 0.0
    %881 = vmatprep.subr.mxu0 0.0
    %882 = vmatpush2.msra.mxu0 0.0
    %883 = vmatprep.subr.mxu0 0.0
    %884 = vmatpush2.msra.mxu0 0.0
    %885 = vmatprep.subr.mxu0 0.0
    %886 = vmatpush2.msra.mxu0 0.0
    %887 = vmatprep.subr.mxu0 0.0
    %888 = vmatpush2.msra.mxu0 0.0
    %889 = vmatprep.subr.mxu0 0.0
    %890 = vmatpush2.msra.mxu0 0.0
    %891 = vmatprep.subr.mxu0 0.0
    %892 = vmatpush2.msra.mxu0 0.0
    %893 = vmatprep.subr.mxu0 0.0
    %894 = vmatpush2.msra.mxu0 0.0
    %895 = vmatprep.mubr.f32.mxu0 0.0
    %896 = vmatmul.mubr.f32.gmra.mxu0 %v829
    %v897 = vpop.f32.mrf.mxu0
    %v898 = vadd.f32 0.0, %v897
    %v899 = vpop.f32.mrf.mxu0
    %900 = vdwg.mxu0
    %v901 = vlaneseq
    %v902 = vshrl.u32 %v901, 7
    %v903 = vsub.s32 0, %v902
    %v904 = vrot.slane %v27, %v903
    %905 = vrot.lane.b32.xlu0 %v30, 32
    %v906 = vpop.permute.xlu0 %905
    %907 = vrot.lane.b32.xlu0 %v31, 32
    %v908 = vpop.permute.xlu0 %907
    %909 = vrot.lane.b32.xlu0 %v32, 32
    %v910 = vpop.permute.xlu0 %909
    %911 = vrot.lane.b32.xlu0 %v33, 32
    %v912 = vpop.permute.xlu0 %911
    %v918 = vsel %vm169, %v825, 0
    %v921 = vsel %vm169, %v898, 0
    %923 = vmatprep.subr.mxu0 0.0
    %924 = vmatpush1.msra.mxu0 0.0
    %925 = vmatprep.subr.mxu0 0.0
    %926 = vmatpush1.msra.mxu0 0.0
    %927 = vmatprep.subr.mxu0 0.0
    %928 = vmatpush1.msra.mxu0 0.0
    %929 = vmatprep.subr.mxu0 0.0
    %930 = vmatpush1.msra.mxu0 0.0
    %931 = vmatprep.subr.mxu0 0.0
    %932 = vmatpush1.msra.mxu0 0.0
    %933 = vmatprep.subr.mxu0 0.0
    %934 = vmatpush1.msra.mxu0 0.0
    %935 = vmatprep.subr.mxu0 0.0
    %936 = vmatpush1.msra.mxu0 0.0
    %937 = vmatprep.subr.mxu0 0.0
    %938 = vmatpush1.msra.mxu0 0.0
    %939 = vmatprep.subr.mxu0 0.0
    %940 = vmatpush1.msra.mxu0 0.0
    %941 = vmatprep.subr.mxu0 0.0
    %942 = vmatpush1.msra.mxu0 0.0
    %943 = vmatprep.subr.mxu0 0.0
    %944 = vmatpush1.msra.mxu0 0.0
    %945 = vmatprep.subr.mxu0 0.0
    %946 = vmatpush1.msra.mxu0 0.0
    %947 = vmatprep.subr.mxu0 0.0
    %948 = vmatpush1.msra.mxu0 %v912
    %949 = vmatprep.subr.mxu0 0.0
    %950 = vmatpush1.msra.mxu0 %v910
    %951 = vmatprep.subr.mxu0 0.0
    %952 = vmatpush1.msra.mxu0 %v908
    %953 = vmatprep.subr.mxu0 0.0
    %954 = vmatpush1.msra.mxu0 %v906
    %955 = vmatprep.subr.mxu0 0.0
    %956 = vmatpush2.msra.mxu0 0.0
    %957 = vmatprep.subr.mxu0 0.0
    %958 = vmatpush2.msra.mxu0 0.0
    %959 = vmatprep.subr.mxu0 0.0
    %960 = vmatpush2.msra.mxu0 0.0
    %961 = vmatprep.subr.mxu0 0.0
    %962 = vmatpush2.msra.mxu0 0.0
    %963 = vmatprep.subr.mxu0 0.0
    %964 = vmatpush2.msra.mxu0 0.0
    %965 = vmatprep.subr.mxu0 0.0
    %966 = vmatpush2.msra.mxu0 0.0
    %967 = vmatprep.subr.mxu0 0.0
    %968 = vmatpush2.msra.mxu0 0.0
    %969 = vmatprep.subr.mxu0 0.0
    %970 = vmatpush2.msra.mxu0 0.0
    %971 = vmatprep.subr.mxu0 0.0
    %972 = vmatpush2.msra.mxu0 0.0
    %973 = vmatprep.subr.mxu0 0.0
    %974 = vmatpush2.msra.mxu0 0.0
    %975 = vmatprep.subr.mxu0 0.0
    %976 = vmatpush2.msra.mxu0 0.0
    %977 = vmatprep.subr.mxu0 0.0
    %978 = vmatpush2.msra.mxu0 0.0
    %979 = vmatprep.subr.mxu0 0.0
    %980 = vmatpush2.msra.mxu0 0.0
    %981 = vmatprep.subr.mxu0 0.0
    %982 = vmatpush2.msra.mxu0 0.0
    %983 = vmatprep.subr.mxu0 0.0
    %984 = vmatpush2.msra.mxu0 0.0
    %985 = vmatprep.subr.mxu0 0.0
    %986 = vmatpush2.msra.mxu0 0.0
    %987 = vmatprep.mubr.f32.mxu0 0.0
    %988 = vmatmul.mubr.f32.gmra.mxu0 %v918
    %v989 = vpop.f32.mrf.mxu0
    %v990 = vadd.f32 %v904, %v989
    %v991 = vpop.f32.mrf.mxu0
    %992 = vmatprep.mubr.f32.mxu0 0.0
    %993 = vmatmul.mubr.f32.gmra.mxu0 %v921
    %v994 = vpop.f32.mrf.mxu0
    %v995 = vadd.f32 %v904, %v994
    %v996 = vpop.f32.mrf.mxu0
    %997 = vdwg.mxu0
    %v998 = vadd.f32 %v21, %v990
    %v999 = vadd.f32 %v22, %v995
    %v1000 = vsel %vm169, %v998, 0.0
    %1001 = vadd.xlane.f32.xlu0 %v1000
    %v1002 = vpop.xlane.xlu0 %1001
    %v1003 = vsel %vm169, %v999, 0.0
    %1004 = vadd.xlane.f32.xlu0 %v1003
    %v1005 = vpop.xlane.xlu0 %1004
    %v1006 = vmul.f32 %v1002, %v176
    %v1007 = vmul.f32 %v1005, %v176
    %v1008 = vsub.f32 %v998, %v1006
    %v1009 = vsub.f32 %v999, %v1007
    %v1010 = vmul.f32 %v1008, %v1008
    %v1011 = vmul.f32 %v1009, %v1009
    %v1012 = vsel %vm169, %v1010, 0.0
    %1013 = vadd.xlane.f32.xlu0 %v1012
    %v1014 = vpop.xlane.xlu0 %1013
    %v1015 = vsel %vm169, %v1011, 0.0
    %1016 = vadd.xlane.f32.xlu0 %v1015
    %v1017 = vpop.xlane.xlu0 %1016
    %v1018 = vmul.f32 %v1014, %v176
    %v1019 = vmul.f32 %v1017, %v176
    %v1020 = vadd.f32 %v1018, 1e-05
    %v1021 = vadd.f32 %v1019, 1e-05
    %v1022 = vrsqrt.pop %v1020
    %v1023 = vrsqrt.pop %v1021
    %v1024 = vmul.f32 %v1008, %v1022
    %v1025 = vmul.f32 %v1009, %v1023
    %v1026 = vlaneseq
    %v1027 = vshrl.u32 %v1026, 7
    %v1028 = vsub.s32 0, %v1027
    %v1029 = vrot.slane %v25, %v1028
    %v1030 = vmul.f32 %v1024, %v1029
    %v1031 = vmul.f32 %v1025, %v1029
    %v1032 = vlaneseq
    %v1033 = vshrl.u32 %v1032, 7
    %v1034 = vsub.s32 0, %v1033
    %v1035 = vrot.slane %v26, %v1034
    %v1036 = vadd.f32 %v1030, %v1035
    %v1037 = vadd.f32 %v1031, %v1035
    %v1038 = vld [vmem:[%s2] sm:$0xff]
    %v1039 = vld [vmem:[%s2 + $0x8] sm:$0xff]
    %v1040 = vld [vmem:[%s2 + $0x10] sm:$0xff]
    %v1041 = vld [vmem:[%s2 + $0x18] sm:$0xff]
    %v1042 = vlaneseq
    %v1043 = vshrl.u32 %v1042, 7
    %v1044 = vsub.s32 0, %v1043
    %v1045 = vrot.slane %v29, %v1044
    %v1047 = vsel %vm169, %v1036, 0
    %v1050 = vsel %vm169, %v1037, 0
    %1052 = vmatprep.subr.mxu0 0.0
    %1053 = vmatpush1.msra.mxu0 0.0
    %1054 = vmatprep.subr.mxu0 0.0
    %1055 = vmatpush1.msra.mxu0 0.0
    %1056 = vmatprep.subr.mxu0 0.0
    %1057 = vmatpush1.msra.mxu0 0.0
    %1058 = vmatprep.subr.mxu0 0.0
    %1059 = vmatpush1.msra.mxu0 0.0
    %1060 = vmatprep.subr.mxu0 0.0
    %1061 = vmatpush1.msra.mxu0 0.0
    %1062 = vmatprep.subr.mxu0 0.0
    %1063 = vmatpush1.msra.mxu0 0.0
    %1064 = vmatprep.subr.mxu0 0.0
    %1065 = vmatpush1.msra.mxu0 0.0
    %1066 = vmatprep.subr.mxu0 0.0
    %1067 = vmatpush1.msra.mxu0 0.0
    %1068 = vmatprep.subr.mxu0 0.0
    %1069 = vmatpush1.msra.mxu0 0.0
    %1070 = vmatprep.subr.mxu0 0.0
    %1071 = vmatpush1.msra.mxu0 0.0
    %1072 = vmatprep.subr.mxu0 0.0
    %1073 = vmatpush1.msra.mxu0 0.0
    %1074 = vmatprep.subr.mxu0 0.0
    %1075 = vmatpush1.msra.mxu0 0.0
    %1076 = vmatprep.subr.mxu0 0.0
    %1077 = vmatpush1.msra.mxu0 %v1041
    %1078 = vmatprep.subr.mxu0 0.0
    %1079 = vmatpush1.msra.mxu0 %v1040
    %1080 = vmatprep.subr.mxu0 0.0
    %1081 = vmatpush1.msra.mxu0 %v1039
    %1082 = vmatprep.subr.mxu0 0.0
    %1083 = vmatpush1.msra.mxu0 %v1038
    %1084 = vmatprep.subr.mxu0 0.0
    %1085 = vmatpush2.msra.mxu0 0.0
    %1086 = vmatprep.subr.mxu0 0.0
    %1087 = vmatpush2.msra.mxu0 0.0
    %1088 = vmatprep.subr.mxu0 0.0
    %1089 = vmatpush2.msra.mxu0 0.0
    %1090 = vmatprep.subr.mxu0 0.0
    %1091 = vmatpush2.msra.mxu0 0.0
    %1092 = vmatprep.subr.mxu0 0.0
    %1093 = vmatpush2.msra.mxu0 0.0
    %1094 = vmatprep.subr.mxu0 0.0
    %1095 = vmatpush2.msra.mxu0 0.0
    %1096 = vmatprep.subr.mxu0 0.0
    %1097 = vmatpush2.msra.mxu0 0.0
    %1098 = vmatprep.subr.mxu0 0.0
    %1099 = vmatpush2.msra.mxu0 0.0
    %1100 = vmatprep.subr.mxu0 0.0
    %1101 = vmatpush2.msra.mxu0 0.0
    %1102 = vmatprep.subr.mxu0 0.0
    %1103 = vmatpush2.msra.mxu0 0.0
    %1104 = vmatprep.subr.mxu0 0.0
    %1105 = vmatpush2.msra.mxu0 0.0
    %1106 = vmatprep.subr.mxu0 0.0
    %1107 = vmatpush2.msra.mxu0 0.0
    %1108 = vmatprep.subr.mxu0 0.0
    %1109 = vmatpush2.msra.mxu0 0.0
    %1110 = vmatprep.subr.mxu0 0.0
    %1111 = vmatpush2.msra.mxu0 0.0
    %1112 = vmatprep.subr.mxu0 0.0
    %1113 = vmatpush2.msra.mxu0 0.0
    %1114 = vmatprep.subr.mxu0 0.0
    %1115 = vmatpush2.msra.mxu0 0.0
    %1116 = vmatprep.mubr.f32.mxu0 0.0
    %1117 = vmatmul.mubr.f32.gmra.mxu0 %v1047
    %v1118 = vpop.f32.mrf.mxu0
    %v1119 = vadd.f32 %v1045, %v1118
    %v1120 = vpop.f32.mrf.mxu0
    %1121 = vmatprep.mubr.f32.mxu0 0.0
    %1122 = vmatmul.mubr.f32.gmra.mxu0 %v1050
    %v1123 = vpop.f32.mrf.mxu0
    %v1124 = vadd.f32 %v1045, %v1123
    %v1125 = vpop.f32.mrf.mxu0
    %1126 = vdwg.mxu0
    %v1127 = vmax.f32 %v1119, 0.0
    %v1128 = vmax.f32 %v1124, 0.0
    %v1129 = vld [vmem:[%s3] sm:$0xff]
    %v1130 = vld [vmem:[%s3 + $0x8] sm:$0xff]
    %v1131 = vld [vmem:[%s3 + $0x10] sm:$0xff]
    %v1132 = vld [vmem:[%s3 + $0x18] sm:$0xff]
    %v1133 = vld [vmem:[%s3 + $0x20] sm:$0xff]
    %v1134 = vld [vmem:[%s3 + $0x28] sm:$0xff]
    %v1135 = vld [vmem:[%s3 + $0x30] sm:$0xff]
    %v1136 = vld [vmem:[%s3 + $0x38] sm:$0xff]
    %v1137 = vld [vmem:[%s3 + $0x40] sm:$0xff]
    %v1138 = vld [vmem:[%s3 + $0x48] sm:$0xff]
    %v1139 = vld [vmem:[%s3 + $0x50] sm:$0xff]
    %v1140 = vld [vmem:[%s3 + $0x58] sm:$0xff]
    %v1141 = vld [vmem:[%s3 + $0x60] sm:$0xff]
    %v1142 = vld [vmem:[%s3 + $0x68] sm:$0xff]
    %v1143 = vld [vmem:[%s3 + $0x70] sm:$0xff]
    %v1144 = vld [vmem:[%s3 + $0x78] sm:$0xff]
    %v1145 = vlaneseq
    %v1146 = vshrl.u32 %v1145, 7
    %v1147 = vsub.s32 0, %v1146
    %v1148 = vrot.slane %v28, %v1147
    %1149 = vmatprep.subr.mxu0 0.0
    %1150 = vmatpush1.msra.mxu0 %v1144
    %1151 = vmatprep.subr.mxu0 0.0
    %1152 = vmatpush1.msra.mxu0 %v1143
    %1153 = vmatprep.subr.mxu0 0.0
    %1154 = vmatpush1.msra.mxu0 %v1142
    %1155 = vmatprep.subr.mxu0 0.0
    %1156 = vmatpush1.msra.mxu0 %v1141
    %1157 = vmatprep.subr.mxu0 0.0
    %1158 = vmatpush1.msra.mxu0 %v1140
    %1159 = vmatprep.subr.mxu0 0.0
    %1160 = vmatpush1.msra.mxu0 %v1139
    %1161 = vmatprep.subr.mxu0 0.0
    %1162 = vmatpush1.msra.mxu0 %v1138
    %1163 = vmatprep.subr.mxu0 0.0
    %1164 = vmatpush1.msra.mxu0 %v1137
    %1165 = vmatprep.subr.mxu0 0.0
    %1166 = vmatpush1.msra.mxu0 %v1136
    %1167 = vmatprep.subr.mxu0 0.0
    %1168 = vmatpush1.msra.mxu0 %v1135
    %1169 = vmatprep.subr.mxu0 0.0
    %1170 = vmatpush1.msra.mxu0 %v1134
    %1171 = vmatprep.subr.mxu0 0.0
    %1172 = vmatpush1.msra.mxu0 %v1133
    %1173 = vmatprep.subr.mxu0 0.0
    %1174 = vmatpush1.msra.mxu0 %v1132
    %1175 = vmatprep.subr.mxu0 0.0
    %1176 = vmatpush1.msra.mxu0 %v1131
    %1177 = vmatprep.subr.mxu0 0.0
    %1178 = vmatpush1.msra.mxu0 %v1130
    %1179 = vmatprep.subr.mxu0 0.0
    %1180 = vmatpush1.msra.mxu0 %v1129
    %1181 = vmatprep.subr.mxu0 0.0
    %1182 = vmatpush2.msra.mxu0 0.0
    %1183 = vmatprep.subr.mxu0 0.0
    %1184 = vmatpush2.msra.mxu0 0.0
    %1185 = vmatprep.subr.mxu0 0.0
    %1186 = vmatpush2.msra.mxu0 0.0
    %1187 = vmatprep.subr.mxu0 0.0
    %1188 = vmatpush2.msra.mxu0 0.0
    %1189 = vmatprep.subr.mxu0 0.0
    %1190 = vmatpush2.msra.mxu0 0.0
    %1191 = vmatprep.subr.mxu0 0.0
    %1192 = vmatpush2.msra.mxu0 0.0
    %1193 = vmatprep.subr.mxu0 0.0
    %1194 = vmatpush2.msra.mxu0 0.0
    %1195 = vmatprep.subr.mxu0 0.0
    %1196 = vmatpush2.msra.mxu0 0.0
    %1197 = vmatprep.subr.mxu0 0.0
    %1198 = vmatpush2.msra.mxu0 0.0
    %1199 = vmatprep.subr.mxu0 0.0
    %1200 = vmatpush2.msra.mxu0 0.0
    %1201 = vmatprep.subr.mxu0 0.0
    %1202 = vmatpush2.msra.mxu0 0.0
    %1203 = vmatprep.subr.mxu0 0.0
    %1204 = vmatpush2.msra.mxu0 0.0
    %1205 = vmatprep.subr.mxu0 0.0
    %1206 = vmatpush2.msra.mxu0 0.0
    %1207 = vmatprep.subr.mxu0 0.0
    %1208 = vmatpush2.msra.mxu0 0.0
    %1209 = vmatprep.subr.mxu0 0.0
    %1210 = vmatpush2.msra.mxu0 0.0
    %1211 = vmatprep.subr.mxu0 0.0
    %1212 = vmatpush2.msra.mxu0 0.0
    %1213 = vmatprep.mubr.f32.mxu0 0.0
    %1214 = vmatmul.mubr.f32.gmra.mxu0 %v1127
    %v1215 = vpop.f32.mrf.mxu0
    %v1216 = vadd.f32 %v1148, %v1215
    %v1217 = vpop.f32.mrf.mxu0
    %1218 = vmatprep.mubr.f32.mxu0 0.0
    %1219 = vmatmul.mubr.f32.gmra.mxu0 %v1128
    %v1220 = vpop.f32.mrf.mxu0
    %v1221 = vadd.f32 %v1148, %v1220
    %v1222 = vpop.f32.mrf.mxu0
    %1223 = vdwg.mxu0
    %v1224 = vadd.f32 %v998, %v1216
    %v1225 = vadd.f32 %v999, %v1221
    %1226 = vst.msk [vmem:[#allocation2] sm:$0xff] %vm169, %v1224
    %1227 = vst.msk [vmem:[#allocation2 + $0x8] sm:$0xff] %vm169, %v1225
    // Predicated region
    $region22: #{tpu_custom_call.1} parent=1 // pred_check
      _
    $region23: #{tpu_custom_call.1} parent=1 // pred_check_branch
      %1229 = sbr.rel (0) target = $region25
    $region24: #{tpu_custom_call.1} parent=1 // pred_region
      %s1231 = ssub.s32 256, 256
      %1232 = vsyncadd [#allocation3], %s1231
      %s1233 = sshll.u32 [#allocation2], 4
      %s1234 = int_to_ptr.vmem [resolvable:$true] %s1233
      %1239 = dma.vmem_to_hbm [thread:$0]  %s1234, 256, %s5, [#allocation3], 128, 128, 8
    $region25: #{tpu_custom_call.1} parent=1 // pred_fallthru
      _
    // Predicated region
    $region26: #{tpu_custom_call.1} parent=1 // pred_check
      _
    $region27: #{tpu_custom_call.1} parent=1 // pred_check_branch
      %1241 = sbr.rel (0) target = $region29
    $region28: #{tpu_custom_call.1} parent=1 // pred_region
      %1242 = dma.done [#allocation3], 256
    $region29: #{tpu_custom_call.1} parent=1 // pred_fallthru
      _
    %1243 = vsyncpa [#allocation3], 1

</llo_original>
